<compile_context>
chip_gen: v7x
topology: tpu7x:2x2x1
jax: 0.10.0
libtpu: 0.0.40
codegen_flags: <defaults>
</compile_context>

<pallas_src>
import functools

import jax
import jax.numpy as jnp
from jax import lax
from jax.experimental import pallas as pl
from jax.experimental.pallas import tpu as pltpu

C_OUT = 32
K = 3
BN_EPS = 1e-5


def _convnet_kernel(p_ref, w_ref, g_ref, bt_ref, out_ref, *, N, H, W):
    """Fused conv3x3(same) + batch-stat BN + 2x2 maxpool + ReLU.

    p_ref  : (R, KP)    bf16 im2col patches, R = N*H*W, rows ordered
                        (n, ho, h_parity, w_parity, wo), cols (tap, c_in) zero-padded
                        to KP (multiple of 128).
    w_ref  : (KP, 32)   bf16 conv weights, rows (tap, c_in) zero-padded, cols c_out.
    g_ref  : (1, 32)    f32 BN gamma
    bt_ref : (1, 32)    f32 BN beta
    out_ref: (N*Ho, Wo*32) f32 lane-dense pooled+ReLU output, rows (n, ho), cols (wo, c).
    """
    R = N * H * W
    Ho, Wo = H // 2, W // 2

    # (1) conv as ONE im2col matmul: bf16 operands, f32 accumulation, one MXU pass.
    # Zero-padded contraction rows/cols contribute nothing. Conv bias is omitted: it
    # cancels exactly under train-mode BatchNorm.
    z = jnp.dot(p_ref[...], w_ref[...], preferred_element_type=jnp.float32)   # (R, 32)

    # (2) BatchNorm2d training-mode batch stats, single pass, applied as fused
    # per-channel scale/shift.
    # TODO(synk): E[z^2]-mean^2 is cancellation-prone for large R / large |mean|; switch
    # to a two-pass (or shifted/Welford) scheme once the grid is tiled for production.
    inv_r = 1.0 / R
    mean = jnp.sum(z, axis=0, keepdims=True) * inv_r                          # (1, 32)
    var = jnp.sum(z * z, axis=0, keepdims=True) * inv_r - mean * mean         # biased
    scale = g_ref[...] * lax.rsqrt(var + BN_EPS)
    shift = bt_ref[...] - mean * scale
    # TODO(synk): z / zn are (R,32) f32 ~ 64 quarter-lane vregs each; at production R,
    # split into a stats pass plus a chunked (<=256-row) normalize+pool pass
    # (lax.fori_loop(unroll=True) or pltpu.emit_pipeline) so each pass stays resident.
    zn = z * scale + shift                                                    # (R, 32)

    # (3) 2x2 stride-2 max pool, then ReLU (pool and ReLU commute; this order is fine
    # for any gamma sign). Rows were pre-ordered (n, ho, hp, wp, wo) in the wrapper, so
    # the reshape below is a pure major-dim split (layout no-op) and each of the 4 pool
    # partners is a whole contiguous Wo-row group: the pool is register vmax only —
    # no scratch round trip, no strided sublane gathers.
    z4 = zn.reshape(N * Ho, 4, Wo, C_OUT)                # (n,ho) x (hp,wp) x wo x c
    pooled = jnp.maximum(jnp.max(z4, axis=1), 0.0)       # (N*Ho, Wo, 32), ReLU applied

    # Lane-dense store: fold wo into lanes so HBM sees a dense (N*Ho, Wo*32) slab.
    for wo in range(Wo):                                  # static unroll, Wo small
        out_ref[:, wo * C_OUT:(wo + 1) * C_OUT] = pooled[:, wo, :]


@jax.jit
def convnet_forward(x_nchw, conv_w, conv_b, bn_gamma, bn_beta):
    """x_nchw: (N, C, H, W); conv_w: (C_OUT, C, 3, 3) PyTorch layout."""
    del conv_b  # cancels exactly under train-mode BatchNorm (see kernel comment)
    N, C, H, W = x_nchw.shape
    assert H % 2 == 0 and W % 2 == 0
    Ho, Wo = H // 2, W // 2
    KK = K * K
    KP = ((KK * C + 127) // 128) * 128   # contraction padded to full 128-lane tiles

    # --- glue (XLA): NCHW->NHWC, 'same' pad, im2col, pool-friendly row order, bf16 ---
    # TODO(synk): for production shapes don't materialize the 9x im2col tensor in HBM;
    # DMA a halo-padded NHWC row-band into VMEM and build the 9 taps in-kernel with
    # shifted pl.ds / pltpu.roll + edge masks, accumulating 9 depth-C matmuls (the
    # kernel is memory-bound there, so MXU efficiency is irrelevant).
    x_nhwc = jnp.transpose(x_nchw, (0, 2, 3, 1)).astype(jnp.float32)
    x_pad = jnp.pad(x_nhwc, ((0, 0), (1, 1), (1, 1), (0, 0)))
    patches = [x_pad[:, kh:kh + H, kw:kw + W, :] for kh in range(K) for kw in range(K)]
    p = jnp.concatenate(patches, axis=-1)                       # (N, H, W, KK*C)
    # rows -> (n, ho, h_parity, w_parity, wo): the in-kernel 2x2 pool partners become
    # contiguous Wo-row groups (whole-vreg vmax).
    p = p.reshape(N, Ho, 2, Wo, 2, KK * C).transpose(0, 1, 2, 4, 3, 5)
    p = p.reshape(N * H * W, KK * C)
    p = jnp.pad(p, ((0, 0), (0, KP - KK * C))).astype(jnp.bfloat16)

    w_mat = jnp.transpose(conv_w, (2, 3, 1, 0)).reshape(KK * C, C_OUT)
    w_mat = jnp.pad(w_mat, ((0, KP - KK * C), (0, 0))).astype(jnp.bfloat16)
    g2 = bn_gamma.reshape(1, C_OUT).astype(jnp.float32)
    bt2 = bn_beta.reshape(1, C_OUT).astype(jnp.float32)

    kernel = functools.partial(_convnet_kernel, N=N, H=H, W=W)

    # grid=(1,) whole-block is right at this toy size (~130 KiB of operands).
    # TODO(synk): production tiling — grid over N / H row-bands with a two-pass BN
    # (per-band s1/s2 accumulators, then a normalize+pool pass), band axis "parallel"
    # so v7x's 2nd TensorCore isn't idle, band sized against vmem_limit_bytes (halve it
    # on v7x's 64 MiB), and pipeline_mode=pl.Buffered(1) on single-step inputs.
    out = pl.pallas_call(
        kernel,
        out_shape=jax.ShapeDtypeStruct((N * Ho, Wo * C_OUT), jnp.float32),
        grid=(1,),
        in_specs=[
            pl.BlockSpec((N * H * W, KP), lambda i: (0, 0)),
            pl.BlockSpec((KP, C_OUT), lambda i: (0, 0)),
            pl.BlockSpec((1, C_OUT), lambda i: (0, 0)),
            pl.BlockSpec((1, C_OUT), lambda i: (0, 0)),
        ],
        out_specs=pl.BlockSpec((N * Ho, Wo * C_OUT), lambda i: (0, 0)),
        compiler_params=pltpu.CompilerParams(dimension_semantics=("arbitrary",)),
    )(p, w_mat, g2, bt2)

    out_nhwc = out.reshape(N, Ho, Wo, C_OUT)
    return jnp.transpose(out_nhwc, (0, 3, 1, 2))                 # back to NCHW


def convnet_reference(x_nchw, conv_w, conv_b, bn_gamma, bn_beta, operand_dtype):
    """Pure-JAX reference matching PyTorch training-mode forward (bias included; it
    cancels under BN, which the kernel exploits by dropping it).

    operand_dtype=jnp.bfloat16 reproduces the kernel's matmul operand precision
    (f32 accumulation); operand_dtype=jnp.float32 is the full-precision reference.
    """
    precision = lax.Precision.HIGHEST if operand_dtype == jnp.float32 else lax.Precision.DEFAULT
    conv = lax.conv_general_dilated(
        x_nchw.astype(operand_dtype), conv_w.astype(operand_dtype),
        window_strides=(1, 1), padding="SAME",
        dimension_numbers=("NCHW", "OIHW", "NCHW"),
        preferred_element_type=jnp.float32, precision=precision)
    conv = conv + conv_b.reshape(1, C_OUT, 1, 1).astype(jnp.float32)
    mean = jnp.mean(conv, axis=(0, 2, 3), keepdims=True)
    var = jnp.mean((conv - mean) ** 2, axis=(0, 2, 3), keepdims=True)   # biased variance
    bn = (conv - mean) * lax.rsqrt(var + BN_EPS) * bn_gamma.reshape(1, C_OUT, 1, 1) \
         + bn_beta.reshape(1, C_OUT, 1, 1)
    n, co, h, w = bn.shape
    pooled = bn.reshape(n, co, h // 2, 2, w // 2, 2).max(axis=(3, 5))
    return jnp.maximum(pooled, 0.0)


if __name__ == "__main__":
    key = jax.random.PRNGKey(0)
    k_x, k_w, k_b = jax.random.split(key, 3)

    N, C_IN, H, W = 2, 4, 16, 16
    x = jax.random.normal(k_x, (N, C_IN, H, W), dtype=jnp.float32)

    # Deterministic parameter init (shapes from the PyTorch module __init__).
    fan_in = C_IN * K * K
    bound = float(1.0 / (fan_in ** 0.5))
    conv_w = jax.random.uniform(k_w, (C_OUT, C_IN, K, K), jnp.float32, -bound, bound)
    conv_b = jax.random.uniform(k_b, (C_OUT,), jnp.float32, -bound, bound)
    bn_gamma = jnp.ones((C_OUT,), jnp.float32)     # PyTorch BatchNorm2d default init
    bn_beta = jnp.zeros((C_OUT,), jnp.float32)

    out = jax.block_until_ready(convnet_forward(x, conv_w, conv_b, bn_gamma, bn_beta))

    # Tight check vs. a reference using the same matmul operand precision (bf16, f32 acc).
    ref_match = jax.block_until_ready(
        convnet_reference(x, conv_w, conv_b, bn_gamma, bn_beta, jnp.bfloat16))
    # Loose check vs. the full-f32 (HIGHEST) reference: bf16 operand rounding only.
    ref_f32 = jax.block_until_ready(
        convnet_reference(x, conv_w, conv_b, bn_gamma, bn_beta, jnp.float32))

    assert out.shape == (N, C_OUT, H // 2, W // 2), out.shape
    assert jnp.allclose(out, ref_match, rtol=1e-3, atol=1e-3), \
        float(jnp.max(jnp.abs(out - ref_match)))
    assert jnp.allclose(out, ref_f32, rtol=5e-2, atol=5e-2), \
        float(jnp.max(jnp.abs(out - ref_f32)))
    print("KERNEL_OK")
</pallas_src>

<mosaic_0001>
module attributes {stable_mosaic.version = 11 : i64} {
  func.func @_convnet_kernel(%arg0: i32, %arg1: memref<512x128xbf16, #tpu.memory_space<vmem>>, %arg2: memref<128x32xbf16, #tpu.memory_space<vmem>>, %arg3: memref<1x32xf32, #tpu.memory_space<vmem>>, %arg4: memref<1x32xf32, #tpu.memory_space<vmem>>, %arg5: memref<16x256xf32, #tpu.memory_space<vmem>>) attributes {dimension_semantics = [#tpu.dimension_semantics<arbitrary>], iteration_bounds = array<i64: 1>, scalar_prefetch = 0 : i64, scratch_operands = 0 : i64, tpu.core_type = #tpu.core_type<tc>, window_params = [{pipeline_mode = #tpu.pipeline_mode<synchronous>, transform_indices = @transform_0, window_bounds = array<i64: 512, 128>}, {pipeline_mode = #tpu.pipeline_mode<synchronous>, transform_indices = @transform_1, window_bounds = array<i64: 128, 32>}, {pipeline_mode = #tpu.pipeline_mode<synchronous>, transform_indices = @transform_2, window_bounds = array<i64: 1, 32>}, {pipeline_mode = #tpu.pipeline_mode<synchronous>, transform_indices = @transform_3, window_bounds = array<i64: 1, 32>}, {pipeline_mode = #tpu.pipeline_mode<synchronous>, transform_indices = @transform_4, window_bounds = array<i64: 16, 256>}]} {
    %c0 = arith.constant 0 : index
    %c0_0 = arith.constant 0 : index
    %0 = vector.load %arg1[%c0, %c0_0] : memref<512x128xbf16, #tpu.memory_space<vmem>>, vector<512x128xbf16>
    %c0_1 = arith.constant 0 : index
    %c0_2 = arith.constant 0 : index
    %1 = vector.load %arg2[%c0_1, %c0_2] : memref<128x32xbf16, #tpu.memory_space<vmem>>, vector<128x32xbf16>
    %cst = arith.constant dense<0.000000e+00> : vector<512x32xf32>
    %2 = tpu.matmul %0, %1, %cst {dimension_numbers = #tpu.dot_dimension_numbers<[1], [0], [0], [1], [0, 0, 1, 1], [], []>} : vector<512x128xbf16>, vector<128x32xbf16>, vector<512x32xf32> -> vector<512x32xf32>
    %cst_3 = arith.constant dense<0.000000e+00> : vector<32xf32>
    %3 = vector.multi_reduction <add>, %2, %cst_3 [0] : vector<512x32xf32> to vector<32xf32>
    %4 = vector.shape_cast %3 : vector<32xf32> to vector<1x32xf32>
    %cst_4 = arith.constant 0.001953125 : f32
    %5 = vector.broadcast %cst_4 : f32 to vector<1x32xf32>
    %6 = arith.mulf %4, %5 : vector<1x32xf32>
    %7 = arith.mulf %2, %2 : vector<512x32xf32>
    %cst_5 = arith.constant dense<0.000000e+00> : vector<32xf32>
    %8 = vector.multi_reduction <add>, %7, %cst_5 [0] : vector<512x32xf32> to vector<32xf32>
    %9 = vector.shape_cast %8 : vector<32xf32> to vector<1x32xf32>
    %cst_6 = arith.constant 0.001953125 : f32
    %10 = vector.broadcast %cst_6 : f32 to vector<1x32xf32>
    %11 = arith.mulf %9, %10 : vector<1x32xf32>
    %12 = arith.mulf %6, %6 : vector<1x32xf32>
    %13 = arith.subf %11, %12 : vector<1x32xf32>
    %c0_7 = arith.constant 0 : index
    %c0_8 = arith.constant 0 : index
    %14 = vector.load %arg3[%c0_7, %c0_8] : memref<1x32xf32, #tpu.memory_space<vmem>>, vector<1x32xf32>
    %cst_9 = arith.constant 9.99999974E-6 : f32
    %15 = vector.broadcast %cst_9 : f32 to vector<1x32xf32>
    %16 = arith.addf %13, %15 : vector<1x32xf32>
    %17 = math.rsqrt %16 : vector<1x32xf32>
    %18 = arith.mulf %14, %17 : vector<1x32xf32>
    %c0_10 = arith.constant 0 : index
    %c0_11 = arith.constant 0 : index
    %19 = vector.load %arg4[%c0_10, %c0_11] : memref<1x32xf32, #tpu.memory_space<vmem>>, vector<1x32xf32>
    %20 = arith.mulf %6, %18 : vector<1x32xf32>
    %21 = arith.subf %19, %20 : vector<1x32xf32>
    %22 = vector.broadcast %18 : vector<1x32xf32> to vector<512x32xf32>
    %23 = arith.mulf %2, %22 : vector<512x32xf32>
    %24 = vector.broadcast %21 : vector<1x32xf32> to vector<512x32xf32>
    %25 = arith.addf %23, %24 : vector<512x32xf32>
    %26 = vector.shape_cast %25 : vector<512x32xf32> to vector<16x4x8x32xf32>
    %cst_12 = arith.constant dense<0xFF800000> : vector<16x8x32xf32>
    %27 = vector.multi_reduction <maximumf>, %26, %cst_12 [1] : vector<16x4x8x32xf32> to vector<16x8x32xf32>
    %cst_13 = arith.constant 0.000000e+00 : f32
    %28 = vector.broadcast %cst_13 : f32 to vector<16x8x32xf32>
    %29 = arith.maximumf %27, %28 : vector<16x8x32xf32>
    %30 = vector.extract_strided_slice %29 {offsets = [0, 0, 0], sizes = [16, 1, 32], strides = [1, 1, 1]} : vector<16x8x32xf32> to vector<16x1x32xf32>
    %31 = vector.shape_cast %30 : vector<16x1x32xf32> to vector<16x32xf32>
    %c0_14 = arith.constant 0 : index
    %c0_15 = arith.constant 0 : index
    %32 = vector.load %arg5[%c0_14, %c0_15] : memref<16x256xf32, #tpu.memory_space<vmem>>, vector<16x32xf32>
    tpu.vector_store %arg5[%c0_14, %c0_15], %31 {strides = array<i32>} : memref<16x256xf32, #tpu.memory_space<vmem>>, vector<16x32xf32>,
    %33 = vector.extract_strided_slice %29 {offsets = [0, 1, 0], sizes = [16, 1, 32], strides = [1, 1, 1]} : vector<16x8x32xf32> to vector<16x1x32xf32>
    %34 = vector.shape_cast %33 : vector<16x1x32xf32> to vector<16x32xf32>
    %c0_16 = arith.constant 0 : index
    %c32 = arith.constant 32 : index
    %35 = vector.load %arg5[%c0_16, %c32] : memref<16x256xf32, #tpu.memory_space<vmem>>, vector<16x32xf32>
    tpu.vector_store %arg5[%c0_16, %c32], %34 {strides = array<i32>} : memref<16x256xf32, #tpu.memory_space<vmem>>, vector<16x32xf32>,
    %36 = vector.extract_strided_slice %29 {offsets = [0, 2, 0], sizes = [16, 1, 32], strides = [1, 1, 1]} : vector<16x8x32xf32> to vector<16x1x32xf32>
    %37 = vector.shape_cast %36 : vector<16x1x32xf32> to vector<16x32xf32>
    %c0_17 = arith.constant 0 : index
    %c64 = arith.constant 64 : index
    %38 = vector.load %arg5[%c0_17, %c64] : memref<16x256xf32, #tpu.memory_space<vmem>>, vector<16x32xf32>
    tpu.vector_store %arg5[%c0_17, %c64], %37 {strides = array<i32>} : memref<16x256xf32, #tpu.memory_space<vmem>>, vector<16x32xf32>,
    %39 = vector.extract_strided_slice %29 {offsets = [0, 3, 0], sizes = [16, 1, 32], strides = [1, 1, 1]} : vector<16x8x32xf32> to vector<16x1x32xf32>
    %40 = vector.shape_cast %39 : vector<16x1x32xf32> to vector<16x32xf32>
    %c0_18 = arith.constant 0 : index
    %c96 = arith.constant 96 : index
    %41 = vector.load %arg5[%c0_18, %c96] : memref<16x256xf32, #tpu.memory_space<vmem>>, vector<16x32xf32>
    tpu.vector_store %arg5[%c0_18, %c96], %40 {strides = array<i32>} : memref<16x256xf32, #tpu.memory_space<vmem>>, vector<16x32xf32>,
    %42 = vector.extract_strided_slice %29 {offsets = [0, 4, 0], sizes = [16, 1, 32], strides = [1, 1, 1]} : vector<16x8x32xf32> to vector<16x1x32xf32>
    %43 = vector.shape_cast %42 : vector<16x1x32xf32> to vector<16x32xf32>
    %c0_19 = arith.constant 0 : index
    %c128 = arith.constant 128 : index
    %44 = vector.load %arg5[%c0_19, %c128] : memref<16x256xf32, #tpu.memory_space<vmem>>, vector<16x32xf32>
    tpu.vector_store %arg5[%c0_19, %c128], %43 {strides = array<i32>} : memref<16x256xf32, #tpu.memory_space<vmem>>, vector<16x32xf32>,
    %45 = vector.extract_strided_slice %29 {offsets = [0, 5, 0], sizes = [16, 1, 32], strides = [1, 1, 1]} : vector<16x8x32xf32> to vector<16x1x32xf32>
    %46 = vector.shape_cast %45 : vector<16x1x32xf32> to vector<16x32xf32>
    %c0_20 = arith.constant 0 : index
    %c160 = arith.constant 160 : index
    %47 = vector.load %arg5[%c0_20, %c160] : memref<16x256xf32, #tpu.memory_space<vmem>>, vector<16x32xf32>
    tpu.vector_store %arg5[%c0_20, %c160], %46 {strides = array<i32>} : memref<16x256xf32, #tpu.memory_space<vmem>>, vector<16x32xf32>,
    %48 = vector.extract_strided_slice %29 {offsets = [0, 6, 0], sizes = [16, 1, 32], strides = [1, 1, 1]} : vector<16x8x32xf32> to vector<16x1x32xf32>
    %49 = vector.shape_cast %48 : vector<16x1x32xf32> to vector<16x32xf32>
    %c0_21 = arith.constant 0 : index
    %c192 = arith.constant 192 : index
    %50 = vector.load %arg5[%c0_21, %c192] : memref<16x256xf32, #tpu.memory_space<vmem>>, vector<16x32xf32>
    tpu.vector_store %arg5[%c0_21, %c192], %49 {strides = array<i32>} : memref<16x256xf32, #tpu.memory_space<vmem>>, vector<16x32xf32>,
    %51 = vector.extract_strided_slice %29 {offsets = [0, 7, 0], sizes = [16, 1, 32], strides = [1, 1, 1]} : vector<16x8x32xf32> to vector<16x1x32xf32>
    %52 = vector.shape_cast %51 : vector<16x1x32xf32> to vector<16x32xf32>
    %c0_22 = arith.constant 0 : index
    %c224 = arith.constant 224 : index
    %53 = vector.load %arg5[%c0_22, %c224] : memref<16x256xf32, #tpu.memory_space<vmem>>, vector<16x32xf32>
    tpu.vector_store %arg5[%c0_22, %c224], %52 {strides = array<i32>} : memref<16x256xf32, #tpu.memory_space<vmem>>, vector<16x32xf32>,
    return
  }
  func.func @transform_0(%arg0: i32) -> (i32, i32) {
    %c0_i32 = arith.constant 0 : i32
    %c0_i32_0 = arith.constant 0 : i32
    %c0_i32_1 = arith.constant 0 : i32
    return %c0_i32, %c0_i32_0 : i32, i32
  }
  func.func @transform_1(%arg0: i32) -> (i32, i32) {
    %c0_i32 = arith.constant 0 : i32
    %c0_i32_0 = arith.constant 0 : i32
    %c0_i32_1 = arith.constant 0 : i32
    return %c0_i32, %c0_i32_0 : i32, i32
  }
  func.func @transform_2(%arg0: i32) -> (i32, i32) {
    %c0_i32 = arith.constant 0 : i32
    %c0_i32_0 = arith.constant 0 : i32
    %c0_i32_1 = arith.constant 0 : i32
    return %c0_i32, %c0_i32_0 : i32, i32
  }
  func.func @transform_3(%arg0: i32) -> (i32, i32) {
    %c0_i32 = arith.constant 0 : i32
    %c0_i32_0 = arith.constant 0 : i32
    %c0_i32_1 = arith.constant 0 : i32
    return %c0_i32, %c0_i32_0 : i32, i32
  }
  func.func @transform_4(%arg0: i32) -> (i32, i32) {
    %c0_i32 = arith.constant 0 : i32
    %c0_i32_0 = arith.constant 0 : i32
    %c0_i32_1 = arith.constant 0 : i32
    return %c0_i32, %c0_i32_0 : i32, i32
  }
}

</mosaic_0001>

<llo_original>
// kernel: convnet_forward.1
$region0: #{convnet_forward.1}
  #allocation0 [shape = 'u32[]', space=smem, size = 0x4, offset = 0x4, fixed_abs, tag = 'smem constant byte address 0x4 - core index']
  #allocation1 [shape = 'u32[144,128]{1,0:T(1,128)}', space=vmem, size = 0x12000, scoped, tag = 'internal scratch']
  %s0 = inlined_call_operand.vmem [shape: bf16[512,128], index: 0, kind: input, shape index: {}]
  %s1 = inlined_call_operand.vmem [shape: bf16[128,32], index: 1, kind: input, shape index: {}]
  %s2 = inlined_call_operand.vmem [shape: f32[1,32], index: 2, kind: input, shape index: {}]
  %s3 = inlined_call_operand.vmem [shape: f32[1,32], index: 3, kind: input, shape index: {}]
  %s4 = inlined_call_operand.vmem [shape: f32[16,256], index: 4, kind: output, shape index: {}]
  %s5 = sld [smem:[#allocation0]]
  $region26: #{convnet_forward.1} parent=0
    _
  %s7 = ssub.s32 1, %s5
  %s8 = scalar_select 0, %s7, %s5
  // Predicated region
  $region2: #{convnet_forward.1} parent=0 // pred_check
    _
  $region3: #{convnet_forward.1} parent=0 // pred_check_branch
    %10 = sbr.rel (0) target = $region5
  $region4: #{convnet_forward.1} parent=0 // pred_region
    _
  $region5: #{convnet_forward.1} parent=0 // pred_fallthru
    _
  // Predicated region
  $region6: #{convnet_forward.1} parent=0 // pred_check
    _
  $region7: #{convnet_forward.1} parent=0 // pred_check_branch
    %12 = sbr.rel (0) target = $region9
  $region8: #{convnet_forward.1} parent=0 // pred_region
    _
  $region9: #{convnet_forward.1} parent=0 // pred_fallthru
    _
  // Predicated region
  $region10: #{convnet_forward.1} parent=0 // pred_check
    _
  $region11: #{convnet_forward.1} parent=0 // pred_check_branch
    %14 = sbr.rel (0) target = $region13
  $region12: #{convnet_forward.1} parent=0 // pred_region
    _
  $region13: #{convnet_forward.1} parent=0 // pred_fallthru
    _
  // Predicated region
  $region14: #{convnet_forward.1} parent=0 // pred_check
    _
  $region15: #{convnet_forward.1} parent=0 // pred_check_branch
    %16 = sbr.rel (0) target = $region17
  $region16: #{convnet_forward.1} parent=0 // pred_region
    _
  $region17: #{convnet_forward.1} parent=0 // pred_fallthru
    _
  %v18 = vld [vmem:[%s0] sm:$0xf]
  %v19 = vld [vmem:[%s0 + $0x4] sm:$0xf]
  %v20 = vld [vmem:[%s0 + $0x8] sm:$0xf]
  %v21 = vld [vmem:[%s0 + $0xc] sm:$0xf]
  %v22 = vld [vmem:[%s0 + $0x10] sm:$0xf]
  %v23 = vld [vmem:[%s0 + $0x14] sm:$0xf]
  %v24 = vld [vmem:[%s0 + $0x18] sm:$0xf]
  %v25 = vld [vmem:[%s0 + $0x1c] sm:$0xf]
  %v26 = vld [vmem:[%s0 + $0x20] sm:$0xf]
  %v27 = vld [vmem:[%s0 + $0x24] sm:$0xf]
  %v28 = vld [vmem:[%s0 + $0x28] sm:$0xf]
  %v29 = vld [vmem:[%s0 + $0x2c] sm:$0xf]
  %v30 = vld [vmem:[%s0 + $0x30] sm:$0xf]
  %v31 = vld [vmem:[%s0 + $0x34] sm:$0xf]
  %v32 = vld [vmem:[%s0 + $0x38] sm:$0xf]
  %v33 = vld [vmem:[%s0 + $0x3c] sm:$0xf]
  %v34 = vld [vmem:[%s0 + $0x40] sm:$0xf]
  %v35 = vld [vmem:[%s0 + $0x44] sm:$0xf]
  %v36 = vld [vmem:[%s0 + $0x48] sm:$0xf]
  %v37 = vld [vmem:[%s0 + $0x4c] sm:$0xf]
  %v38 = vld [vmem:[%s0 + $0x50] sm:$0xf]
  %v39 = vld [vmem:[%s0 + $0x54] sm:$0xf]
  %v40 = vld [vmem:[%s0 + $0x58] sm:$0xf]
  %v41 = vld [vmem:[%s0 + $0x5c] sm:$0xf]
  %v42 = vld [vmem:[%s0 + $0x60] sm:$0xf]
  %v43 = vld [vmem:[%s0 + $0x64] sm:$0xf]
  %v44 = vld [vmem:[%s0 + $0x68] sm:$0xf]
  %v45 = vld [vmem:[%s0 + $0x6c] sm:$0xf]
  %v46 = vld [vmem:[%s0 + $0x70] sm:$0xf]
  %v47 = vld [vmem:[%s0 + $0x74] sm:$0xf]
  %v48 = vld [vmem:[%s0 + $0x78] sm:$0xf]
  %v49 = vld [vmem:[%s0 + $0x7c] sm:$0xf]
  %v50 = vld [vmem:[%s0 + $0x80] sm:$0xf]
  %v51 = vld [vmem:[%s0 + $0x84] sm:$0xf]
  %v52 = vld [vmem:[%s0 + $0x88] sm:$0xf]
  %v53 = vld [vmem:[%s0 + $0x8c] sm:$0xf]
  %v54 = vld [vmem:[%s0 + $0x90] sm:$0xf]
  %v55 = vld [vmem:[%s0 + $0x94] sm:$0xf]
  %v56 = vld [vmem:[%s0 + $0x98] sm:$0xf]
  %v57 = vld [vmem:[%s0 + $0x9c] sm:$0xf]
  %v58 = vld [vmem:[%s0 + $0xa0] sm:$0xf]
  %v59 = vld [vmem:[%s0 + $0xa4] sm:$0xf]
  %v60 = vld [vmem:[%s0 + $0xa8] sm:$0xf]
  %v61 = vld [vmem:[%s0 + $0xac] sm:$0xf]
  %v62 = vld [vmem:[%s0 + $0xb0] sm:$0xf]
  %v63 = vld [vmem:[%s0 + $0xb4] sm:$0xf]
  %v64 = vld [vmem:[%s0 + $0xb8] sm:$0xf]
  %v65 = vld [vmem:[%s0 + $0xbc] sm:$0xf]
  %v66 = vld [vmem:[%s0 + $0xc0] sm:$0xf]
  %v67 = vld [vmem:[%s0 + $0xc4] sm:$0xf]
  %v68 = vld [vmem:[%s0 + $0xc8] sm:$0xf]
  %v69 = vld [vmem:[%s0 + $0xcc] sm:$0xf]
  %v70 = vld [vmem:[%s0 + $0xd0] sm:$0xf]
  %v71 = vld [vmem:[%s0 + $0xd4] sm:$0xf]
  %v72 = vld [vmem:[%s0 + $0xd8] sm:$0xf]
  %v73 = vld [vmem:[%s0 + $0xdc] sm:$0xf]
  %v74 = vld [vmem:[%s0 + $0xe0] sm:$0xf]
  %v75 = vld [vmem:[%s0 + $0xe4] sm:$0xf]
  %v76 = vld [vmem:[%s0 + $0xe8] sm:$0xf]
  %v77 = vld [vmem:[%s0 + $0xec] sm:$0xf]
  %v78 = vld [vmem:[%s0 + $0xf0] sm:$0xf]
  %v79 = vld [vmem:[%s0 + $0xf4] sm:$0xf]
  %v80 = vld [vmem:[%s0 + $0xf8] sm:$0xf]
  %v81 = vld [vmem:[%s0 + $0xfc] sm:$0xf]
  %v82 = vld [vmem:[%s1] sm:$0xf]
  %v83 = vld [vmem:[%s1 + $0x4] sm:$0xf]
  %v84 = vld [vmem:[%s1 + $0x8] sm:$0xf]
  %v85 = vld [vmem:[%s1 + $0xc] sm:$0xf]
  %v86 = vld [vmem:[%s1 + $0x10] sm:$0xf]
  %v87 = vld [vmem:[%s1 + $0x14] sm:$0xf]
  %v88 = vld [vmem:[%s1 + $0x18] sm:$0xf]
  %v89 = vld [vmem:[%s1 + $0x1c] sm:$0xf]
  %v90 = vld [vmem:[%s1 + $0x20] sm:$0xf]
  %v91 = vld [vmem:[%s1 + $0x24] sm:$0xf]
  %v92 = vld [vmem:[%s1 + $0x28] sm:$0xf]
  %v93 = vld [vmem:[%s1 + $0x2c] sm:$0xf]
  %v94 = vld [vmem:[%s1 + $0x30] sm:$0xf]
  %v95 = vld [vmem:[%s1 + $0x34] sm:$0xf]
  %v96 = vld [vmem:[%s1 + $0x38] sm:$0xf]
  %v97 = vld [vmem:[%s1 + $0x3c] sm:$0xf]
  %v162 = vunpack.c.l.b16 %v18
  %v163 = vunpack.c.l.b16 %v19
  %v164 = vunpack.c.l.b16 %v20
  %v165 = vunpack.c.l.b16 %v21
  %v166 = vunpack.c.l.b16 %v22
  %v167 = vunpack.c.l.b16 %v23
  %v168 = vunpack.c.l.b16 %v24
  %v169 = vunpack.c.l.b16 %v25
  %v170 = vunpack.c.l.b16 %v26
  %v171 = vunpack.c.l.b16 %v27
  %v172 = vunpack.c.l.b16 %v28
  %v173 = vunpack.c.l.b16 %v29
  %v174 = vunpack.c.l.b16 %v30
  %v175 = vunpack.c.l.b16 %v31
  %v176 = vunpack.c.l.b16 %v32
  %v177 = vunpack.c.l.b16 %v33
  %v178 = vunpack.c.l.b16 %v34
  %v179 = vunpack.c.l.b16 %v35
  %v180 = vunpack.c.l.b16 %v36
  %v181 = vunpack.c.l.b16 %v37
  %v182 = vunpack.c.l.b16 %v38
  %v183 = vunpack.c.l.b16 %v39
  %v184 = vunpack.c.l.b16 %v40
  %v185 = vunpack.c.l.b16 %v41
  %v186 = vunpack.c.l.b16 %v42
  %v187 = vunpack.c.l.b16 %v43
  %v188 = vunpack.c.l.b16 %v44
  %v189 = vunpack.c.l.b16 %v45
  %v190 = vunpack.c.l.b16 %v46
  %v191 = vunpack.c.l.b16 %v47
  %v192 = vunpack.c.l.b16 %v48
  %v193 = vunpack.c.l.b16 %v49
  %v194 = vunpack.c.l.b16 %v50
  %v195 = vunpack.c.l.b16 %v51
  %v196 = vunpack.c.l.b16 %v52
  %v197 = vunpack.c.l.b16 %v53
  %v198 = vunpack.c.l.b16 %v54
  %v199 = vunpack.c.l.b16 %v55
  %v200 = vunpack.c.l.b16 %v56
  %v201 = vunpack.c.l.b16 %v57
  %v202 = vunpack.c.l.b16 %v58
  %v203 = vunpack.c.l.b16 %v59
  %v204 = vunpack.c.l.b16 %v60
  %v205 = vunpack.c.l.b16 %v61
  %v206 = vunpack.c.l.b16 %v62
  %v207 = vunpack.c.l.b16 %v63
  %v208 = vunpack.c.l.b16 %v64
  %v209 = vunpack.c.l.b16 %v65
  %v210 = vunpack.c.l.b16 %v66
  %v211 = vunpack.c.l.b16 %v67
  %v212 = vunpack.c.l.b16 %v68
  %v213 = vunpack.c.l.b16 %v69
  %v214 = vunpack.c.l.b16 %v70
  %v215 = vunpack.c.l.b16 %v71
  %v216 = vunpack.c.l.b16 %v72
  %v217 = vunpack.c.l.b16 %v73
  %v218 = vunpack.c.l.b16 %v74
  %v219 = vunpack.c.l.b16 %v75
  %v220 = vunpack.c.l.b16 %v76
  %v221 = vunpack.c.l.b16 %v77
  %v222 = vunpack.c.l.b16 %v78
  %v223 = vunpack.c.l.b16 %v79
  %v224 = vunpack.c.l.b16 %v80
  %v225 = vunpack.c.l.b16 %v81
  %v226 = vpack.c.b16 %v163, %v162
  %v227 = vpack.c.b16 %v165, %v164
  %v228 = vpack.c.b16 %v167, %v166
  %v229 = vpack.c.b16 %v169, %v168
  %v230 = vpack.c.b16 %v171, %v170
  %v231 = vpack.c.b16 %v173, %v172
  %v232 = vpack.c.b16 %v175, %v174
  %v233 = vpack.c.b16 %v177, %v176
  %v234 = vpack.c.b16 %v179, %v178
  %v235 = vpack.c.b16 %v181, %v180
  %v236 = vpack.c.b16 %v183, %v182
  %v237 = vpack.c.b16 %v185, %v184
  %v238 = vpack.c.b16 %v187, %v186
  %v239 = vpack.c.b16 %v189, %v188
  %v240 = vpack.c.b16 %v191, %v190
  %v241 = vpack.c.b16 %v193, %v192
  %v242 = vpack.c.b16 %v195, %v194
  %v243 = vpack.c.b16 %v197, %v196
  %v244 = vpack.c.b16 %v199, %v198
  %v245 = vpack.c.b16 %v201, %v200
  %v246 = vpack.c.b16 %v203, %v202
  %v247 = vpack.c.b16 %v205, %v204
  %v248 = vpack.c.b16 %v207, %v206
  %v249 = vpack.c.b16 %v209, %v208
  %v250 = vpack.c.b16 %v211, %v210
  %v251 = vpack.c.b16 %v213, %v212
  %v252 = vpack.c.b16 %v215, %v214
  %v253 = vpack.c.b16 %v217, %v216
  %v254 = vpack.c.b16 %v219, %v218
  %v255 = vpack.c.b16 %v221, %v220
  %v256 = vpack.c.b16 %v223, %v222
  %v257 = vpack.c.b16 %v225, %v224
  %v306 = vunpack.c.l.b16 %v82
  %v307 = vunpack.c.l.b16 %v83
  %v308 = vunpack.c.l.b16 %v84
  %v309 = vunpack.c.l.b16 %v85
  %v310 = vunpack.c.l.b16 %v86
  %v311 = vunpack.c.l.b16 %v87
  %v312 = vunpack.c.l.b16 %v88
  %v313 = vunpack.c.l.b16 %v89
  %v314 = vunpack.c.l.b16 %v90
  %v315 = vunpack.c.l.b16 %v91
  %v316 = vunpack.c.l.b16 %v92
  %v317 = vunpack.c.l.b16 %v93
  %v318 = vunpack.c.l.b16 %v94
  %v319 = vunpack.c.l.b16 %v95
  %v320 = vunpack.c.l.b16 %v96
  %v321 = vunpack.c.l.b16 %v97
  %v322 = vpack.c.b16 %v307, %v306
  %v323 = vpack.c.b16 %v309, %v308
  %v324 = vpack.c.b16 %v311, %v310
  %v325 = vpack.c.b16 %v313, %v312
  %v326 = vpack.c.b16 %v315, %v314
  %v327 = vpack.c.b16 %v317, %v316
  %v328 = vpack.c.b16 %v319, %v318
  %v329 = vpack.c.b16 %v321, %v320
  %338 = vmatprep.subr.bf16.mxu0 0
  %339 = vmatpush1.bf16.msra.mxu0 %v322
  %340 = vmatprep.subr.bf16.mxu0 0
  %341 = vmatpush1.bf16.msra.mxu0 %v323
  %342 = vmatprep.subr.bf16.mxu0 0
  %343 = vmatpush1.bf16.msra.mxu0 %v324
  %344 = vmatprep.subr.bf16.mxu0 0
  %345 = vmatpush1.bf16.msra.mxu0 %v325
  %346 = vmatprep.subr.bf16.mxu0 0
  %347 = vmatpush1.bf16.msra.mxu0 %v326
  %348 = vmatprep.subr.bf16.mxu0 0
  %349 = vmatpush1.bf16.msra.mxu0 %v327
  %350 = vmatprep.subr.bf16.mxu0 0
  %351 = vmatpush1.bf16.msra.mxu0 %v328
  %352 = vmatprep.subr.bf16.mxu0 0
  %353 = vmatpush1.bf16.msra.mxu0 %v329
  %354 = vmatprep.subr.bf16.mxu0 0
  %355 = vmatpush1.bf16.msra.mxu0 0
  %356 = vmatprep.subr.bf16.mxu0 0
  %357 = vmatpush1.bf16.msra.mxu0 0
  %358 = vmatprep.subr.bf16.mxu0 0
  %359 = vmatpush1.bf16.msra.mxu0 0
  %360 = vmatprep.subr.bf16.mxu0 0
  %361 = vmatpush1.bf16.msra.mxu0 0
  %362 = vmatprep.subr.bf16.mxu0 0
  %363 = vmatpush1.bf16.msra.mxu0 0
  %364 = vmatprep.subr.bf16.mxu0 0
  %365 = vmatpush1.bf16.msra.mxu0 0
  %366 = vmatprep.subr.bf16.mxu0 0
  %367 = vmatpush1.bf16.msra.mxu0 0
  %368 = vmatprep.subr.bf16.mxu0 0
  %369 = vmatpush1.bf16.msra.mxu0 0
  %370 = vmatprep.mubr.bf16.mxu0 0
  %371 = vmatmul.mubr.bf16.gmra.mrb[0].mxu0 %v226
  %v372 = vpop.f32.mrb[0].mxu0
  %v373 = vadd.f32 0.0, %v372
  %v374 = vpop.f32.mrb[0].mxu0
  %v375 = vpop.f32.mrb[0].mxu0
  %v376 = vadd.f32 0.0, %v375
  %v377 = vpop.f32.mrb[0].mxu0
  %378 = vmatprep.mubr.bf16.mxu0 0
  %379 = vmatmul.mubr.bf16.gmra.mrb[0].mxu0 %v227
  %v380 = vpop.f32.mrb[0].mxu0
  %v381 = vadd.f32 0.0, %v380
  %v382 = vpop.f32.mrb[0].mxu0
  %v383 = vpop.f32.mrb[0].mxu0
  %v384 = vadd.f32 0.0, %v383
  %v385 = vpop.f32.mrb[0].mxu0
  %386 = vmatprep.mubr.bf16.mxu0 0
  %387 = vmatmul.mubr.bf16.gmra.mrb[0].mxu0 %v228
  %v388 = vpop.f32.mrb[0].mxu0
  %v389 = vadd.f32 0.0, %v388
  %v390 = vpop.f32.mrb[0].mxu0
  %v391 = vpop.f32.mrb[0].mxu0
  %v392 = vadd.f32 0.0, %v391
  %v393 = vpop.f32.mrb[0].mxu0
  %394 = vmatprep.mubr.bf16.mxu0 0
  %395 = vmatmul.mubr.bf16.gmra.mrb[0].mxu0 %v229
  %v396 = vpop.f32.mrb[0].mxu0
  %v397 = vadd.f32 0.0, %v396
  %v398 = vpop.f32.mrb[0].mxu0
  %v399 = vpop.f32.mrb[0].mxu0
  %v400 = vadd.f32 0.0, %v399
  %v401 = vpop.f32.mrb[0].mxu0
  %402 = vmatprep.mubr.bf16.mxu0 0
  %403 = vmatmul.mubr.bf16.gmra.mrb[0].mxu0 %v230
  %v404 = vpop.f32.mrb[0].mxu0
  %v405 = vadd.f32 0.0, %v404
  %v406 = vpop.f32.mrb[0].mxu0
  %v407 = vpop.f32.mrb[0].mxu0
  %v408 = vadd.f32 0.0, %v407
  %v409 = vpop.f32.mrb[0].mxu0
  %410 = vmatprep.mubr.bf16.mxu0 0
  %411 = vmatmul.mubr.bf16.gmra.mrb[0].mxu0 %v231
  %v412 = vpop.f32.mrb[0].mxu0
  %v413 = vadd.f32 0.0, %v412
  %v414 = vpop.f32.mrb[0].mxu0
  %v415 = vpop.f32.mrb[0].mxu0
  %v416 = vadd.f32 0.0, %v415
  %v417 = vpop.f32.mrb[0].mxu0
  %418 = vmatprep.mubr.bf16.mxu0 0
  %419 = vmatmul.mubr.bf16.gmra.mrb[0].mxu0 %v232
  %v420 = vpop.f32.mrb[0].mxu0
  %v421 = vadd.f32 0.0, %v420
  %v422 = vpop.f32.mrb[0].mxu0
  %v423 = vpop.f32.mrb[0].mxu0
  %v424 = vadd.f32 0.0, %v423
  %v425 = vpop.f32.mrb[0].mxu0
  %426 = vmatprep.mubr.bf16.mxu0 0
  %427 = vmatmul.mubr.bf16.gmra.mrb[0].mxu0 %v233
  %v428 = vpop.f32.mrb[0].mxu0
  %v429 = vadd.f32 0.0, %v428
  %v430 = vpop.f32.mrb[0].mxu0
  %v431 = vpop.f32.mrb[0].mxu0
  %v432 = vadd.f32 0.0, %v431
  %v433 = vpop.f32.mrb[0].mxu0
  %434 = vmatprep.mubr.bf16.mxu0 0
  %435 = vmatmul.mubr.bf16.gmra.mrb[0].mxu0 %v234
  %v436 = vpop.f32.mrb[0].mxu0
  %v437 = vadd.f32 0.0, %v436
  %v438 = vpop.f32.mrb[0].mxu0
  %v439 = vpop.f32.mrb[0].mxu0
  %v440 = vadd.f32 0.0, %v439
  %v441 = vpop.f32.mrb[0].mxu0
  %442 = vmatprep.mubr.bf16.mxu0 0
  %443 = vmatmul.mubr.bf16.gmra.mrb[0].mxu0 %v235
  %v444 = vpop.f32.mrb[0].mxu0
  %v445 = vadd.f32 0.0, %v444
  %v446 = vpop.f32.mrb[0].mxu0
  %v447 = vpop.f32.mrb[0].mxu0
  %v448 = vadd.f32 0.0, %v447
  %v449 = vpop.f32.mrb[0].mxu0
  %450 = vmatprep.mubr.bf16.mxu0 0
  %451 = vmatmul.mubr.bf16.gmra.mrb[0].mxu0 %v236
  %v452 = vpop.f32.mrb[0].mxu0
  %v453 = vadd.f32 0.0, %v452
  %v454 = vpop.f32.mrb[0].mxu0
  %v455 = vpop.f32.mrb[0].mxu0
  %v456 = vadd.f32 0.0, %v455
  %v457 = vpop.f32.mrb[0].mxu0
  %458 = vmatprep.mubr.bf16.mxu0 0
  %459 = vmatmul.mubr.bf16.gmra.mrb[0].mxu0 %v237
  %v460 = vpop.f32.mrb[0].mxu0
  %v461 = vadd.f32 0.0, %v460
  %v462 = vpop.f32.mrb[0].mxu0
  %v463 = vpop.f32.mrb[0].mxu0
  %v464 = vadd.f32 0.0, %v463
  %v465 = vpop.f32.mrb[0].mxu0
  %466 = vmatprep.mubr.bf16.mxu0 0
  %467 = vmatmul.mubr.bf16.gmra.mrb[0].mxu0 %v238
  %v468 = vpop.f32.mrb[0].mxu0
  %v469 = vadd.f32 0.0, %v468
  %v470 = vpop.f32.mrb[0].mxu0
  %v471 = vpop.f32.mrb[0].mxu0
  %v472 = vadd.f32 0.0, %v471
  %v473 = vpop.f32.mrb[0].mxu0
  %474 = vmatprep.mubr.bf16.mxu0 0
  %475 = vmatmul.mubr.bf16.gmra.mrb[0].mxu0 %v239
  %v476 = vpop.f32.mrb[0].mxu0
  %v477 = vadd.f32 0.0, %v476
  %v478 = vpop.f32.mrb[0].mxu0
  %v479 = vpop.f32.mrb[0].mxu0
  %v480 = vadd.f32 0.0, %v479
  %v481 = vpop.f32.mrb[0].mxu0
  %482 = vmatprep.mubr.bf16.mxu0 0
  %483 = vmatmul.mubr.bf16.gmra.mrb[0].mxu0 %v240
  %v484 = vpop.f32.mrb[0].mxu0
  %v485 = vadd.f32 0.0, %v484
  %v486 = vpop.f32.mrb[0].mxu0
  %v487 = vpop.f32.mrb[0].mxu0
  %v488 = vadd.f32 0.0, %v487
  %v489 = vpop.f32.mrb[0].mxu0
  %490 = vmatprep.mubr.bf16.mxu0 0
  %491 = vmatmul.mubr.bf16.gmra.mrb[0].mxu0 %v241
  %v492 = vpop.f32.mrb[0].mxu0
  %v493 = vadd.f32 0.0, %v492
  %v494 = vpop.f32.mrb[0].mxu0
  %v495 = vpop.f32.mrb[0].mxu0
  %v496 = vadd.f32 0.0, %v495
  %v497 = vpop.f32.mrb[0].mxu0
  %498 = vmatprep.mubr.bf16.mxu0 0
  %499 = vmatmul.mubr.bf16.gmra.mrb[0].mxu0 %v242
  %v500 = vpop.f32.mrb[0].mxu0
  %v501 = vadd.f32 0.0, %v500
  %v502 = vpop.f32.mrb[0].mxu0
  %v503 = vpop.f32.mrb[0].mxu0
  %v504 = vadd.f32 0.0, %v503
  %v505 = vpop.f32.mrb[0].mxu0
  %506 = vmatprep.mubr.bf16.mxu0 0
  %507 = vmatmul.mubr.bf16.gmra.mrb[0].mxu0 %v243
  %v508 = vpop.f32.mrb[0].mxu0
  %v509 = vadd.f32 0.0, %v508
  %v510 = vpop.f32.mrb[0].mxu0
  %v511 = vpop.f32.mrb[0].mxu0
  %v512 = vadd.f32 0.0, %v511
  %v513 = vpop.f32.mrb[0].mxu0
  %514 = vmatprep.mubr.bf16.mxu0 0
  %515 = vmatmul.mubr.bf16.gmra.mrb[0].mxu0 %v244
  %v516 = vpop.f32.mrb[0].mxu0
  %v517 = vadd.f32 0.0, %v516
  %v518 = vpop.f32.mrb[0].mxu0
  %v519 = vpop.f32.mrb[0].mxu0
  %v520 = vadd.f32 0.0, %v519
  %v521 = vpop.f32.mrb[0].mxu0
  %522 = vmatprep.mubr.bf16.mxu0 0
  %523 = vmatmul.mubr.bf16.gmra.mrb[0].mxu0 %v245
  %v524 = vpop.f32.mrb[0].mxu0
  %v525 = vadd.f32 0.0, %v524
  %v526 = vpop.f32.mrb[0].mxu0
  %v527 = vpop.f32.mrb[0].mxu0
  %v528 = vadd.f32 0.0, %v527
  %v529 = vpop.f32.mrb[0].mxu0
  %530 = vmatprep.mubr.bf16.mxu0 0
  %531 = vmatmul.mubr.bf16.gmra.mrb[0].mxu0 %v246
  %v532 = vpop.f32.mrb[0].mxu0
  %v533 = vadd.f32 0.0, %v532
  %v534 = vpop.f32.mrb[0].mxu0
  %v535 = vpop.f32.mrb[0].mxu0
  %v536 = vadd.f32 0.0, %v535
  %v537 = vpop.f32.mrb[0].mxu0
  %538 = vmatprep.mubr.bf16.mxu0 0
  %539 = vmatmul.mubr.bf16.gmra.mrb[0].mxu0 %v247
  %v540 = vpop.f32.mrb[0].mxu0
  %v541 = vadd.f32 0.0, %v540
  %v542 = vpop.f32.mrb[0].mxu0
  %v543 = vpop.f32.mrb[0].mxu0
  %v544 = vadd.f32 0.0, %v543
  %v545 = vpop.f32.mrb[0].mxu0
  %546 = vmatprep.mubr.bf16.mxu0 0
  %547 = vmatmul.mubr.bf16.gmra.mrb[0].mxu0 %v248
  %v548 = vpop.f32.mrb[0].mxu0
  %v549 = vadd.f32 0.0, %v548
  %v550 = vpop.f32.mrb[0].mxu0
  %v551 = vpop.f32.mrb[0].mxu0
  %v552 = vadd.f32 0.0, %v551
  %v553 = vpop.f32.mrb[0].mxu0
  %554 = vmatprep.mubr.bf16.mxu0 0
  %555 = vmatmul.mubr.bf16.gmra.mrb[0].mxu0 %v249
  %v556 = vpop.f32.mrb[0].mxu0
  %v557 = vadd.f32 0.0, %v556
  %v558 = vpop.f32.mrb[0].mxu0
  %v559 = vpop.f32.mrb[0].mxu0
  %v560 = vadd.f32 0.0, %v559
  %v561 = vpop.f32.mrb[0].mxu0
  %562 = vmatprep.mubr.bf16.mxu0 0
  %563 = vmatmul.mubr.bf16.gmra.mrb[0].mxu0 %v250
  %v564 = vpop.f32.mrb[0].mxu0
  %v565 = vadd.f32 0.0, %v564
  %v566 = vpop.f32.mrb[0].mxu0
  %v567 = vpop.f32.mrb[0].mxu0
  %v568 = vadd.f32 0.0, %v567
  %v569 = vpop.f32.mrb[0].mxu0
  %570 = vmatprep.mubr.bf16.mxu0 0
  %571 = vmatmul.mubr.bf16.gmra.mrb[0].mxu0 %v251
  %v572 = vpop.f32.mrb[0].mxu0
  %v573 = vadd.f32 0.0, %v572
  %v574 = vpop.f32.mrb[0].mxu0
  %v575 = vpop.f32.mrb[0].mxu0
  %v576 = vadd.f32 0.0, %v575
  %v577 = vpop.f32.mrb[0].mxu0
  %578 = vmatprep.mubr.bf16.mxu0 0
  %579 = vmatmul.mubr.bf16.gmra.mrb[0].mxu0 %v252
  %v580 = vpop.f32.mrb[0].mxu0
  %v581 = vadd.f32 0.0, %v580
  %v582 = vpop.f32.mrb[0].mxu0
  %v583 = vpop.f32.mrb[0].mxu0
  %v584 = vadd.f32 0.0, %v583
  %v585 = vpop.f32.mrb[0].mxu0
  %586 = vmatprep.mubr.bf16.mxu0 0
  %587 = vmatmul.mubr.bf16.gmra.mrb[0].mxu0 %v253
  %v588 = vpop.f32.mrb[0].mxu0
  %v589 = vadd.f32 0.0, %v588
  %v590 = vpop.f32.mrb[0].mxu0
  %v591 = vpop.f32.mrb[0].mxu0
  %v592 = vadd.f32 0.0, %v591
  %v593 = vpop.f32.mrb[0].mxu0
  %594 = vmatprep.mubr.bf16.mxu0 0
  %595 = vmatmul.mubr.bf16.gmra.mrb[0].mxu0 %v254
  %v596 = vpop.f32.mrb[0].mxu0
  %v597 = vadd.f32 0.0, %v596
  %v598 = vpop.f32.mrb[0].mxu0
  %v599 = vpop.f32.mrb[0].mxu0
  %v600 = vadd.f32 0.0, %v599
  %v601 = vpop.f32.mrb[0].mxu0
  %602 = vmatprep.mubr.bf16.mxu0 0
  %603 = vmatmul.mubr.bf16.gmra.mrb[0].mxu0 %v255
  %v604 = vpop.f32.mrb[0].mxu0
  %v605 = vadd.f32 0.0, %v604
  %v606 = vpop.f32.mrb[0].mxu0
  %v607 = vpop.f32.mrb[0].mxu0
  %v608 = vadd.f32 0.0, %v607
  %v609 = vpop.f32.mrb[0].mxu0
  %610 = vmatprep.mubr.bf16.mxu0 0
  %611 = vmatmul.mubr.bf16.gmra.mrb[0].mxu0 %v256
  %v612 = vpop.f32.mrb[0].mxu0
  %v613 = vadd.f32 0.0, %v612
  %v614 = vpop.f32.mrb[0].mxu0
  %v615 = vpop.f32.mrb[0].mxu0
  %v616 = vadd.f32 0.0, %v615
  %v617 = vpop.f32.mrb[0].mxu0
  %618 = vmatprep.mubr.bf16.mxu0 0
  %619 = vmatmul.mubr.bf16.gmra.mrb[0].mxu0 %v257
  %v620 = vpop.f32.mrb[0].mxu0
  %v621 = vadd.f32 0.0, %v620
  %v622 = vpop.f32.mrb[0].mxu0
  %v623 = vpop.f32.mrb[0].mxu0
  %v624 = vadd.f32 0.0, %v623
  %v625 = vpop.f32.mrb[0].mxu0
  %626 = vdwg.mxu0
  %vm627 = vcmask 261120
  %v628 = vsel %vm627, %v373, 0.0
  %v629 = vsel %vm627, %v376, 0.0
  %v630 = vadd.f32 %v628, %v629
  %v631 = vsel %vm627, %v381, 0.0
  %v632 = vadd.f32 %v630, %v631
  %v633 = vsel %vm627, %v384, 0.0
  %v634 = vadd.f32 %v632, %v633
  %v635 = vsel %vm627, %v389, 0.0
  %v636 = vadd.f32 %v634, %v635
  %v637 = vsel %vm627, %v392, 0.0
  %v638 = vadd.f32 %v636, %v637
  %v639 = vsel %vm627, %v397, 0.0
  %v640 = vadd.f32 %v638, %v639
  %v641 = vsel %vm627, %v400, 0.0
  %v642 = vadd.f32 %v640, %v641
  %v643 = vsel %vm627, %v405, 0.0
  %v644 = vadd.f32 %v642, %v643
  %v645 = vsel %vm627, %v408, 0.0
  %v646 = vadd.f32 %v644, %v645
  %v647 = vsel %vm627, %v413, 0.0
  %v648 = vadd.f32 %v646, %v647
  %v649 = vsel %vm627, %v416, 0.0
  %v650 = vadd.f32 %v648, %v649
  %v651 = vsel %vm627, %v421, 0.0
  %v652 = vadd.f32 %v650, %v651
  %v653 = vsel %vm627, %v424, 0.0
  %v654 = vadd.f32 %v652, %v653
  %v655 = vsel %vm627, %v429, 0.0
  %v656 = vadd.f32 %v654, %v655
  %v657 = vsel %vm627, %v432, 0.0
  %v658 = vadd.f32 %v656, %v657
  %v659 = vsel %vm627, %v437, 0.0
  %v660 = vadd.f32 %v658, %v659
  %v661 = vsel %vm627, %v440, 0.0
  %v662 = vadd.f32 %v660, %v661
  %v663 = vsel %vm627, %v445, 0.0
  %v664 = vadd.f32 %v662, %v663
  %v665 = vsel %vm627, %v448, 0.0
  %v666 = vadd.f32 %v664, %v665
  %v667 = vsel %vm627, %v453, 0.0
  %v668 = vadd.f32 %v666, %v667
  %v669 = vsel %vm627, %v456, 0.0
  %v670 = vadd.f32 %v668, %v669
  %v671 = vsel %vm627, %v461, 0.0
  %v672 = vadd.f32 %v670, %v671
  %v673 = vsel %vm627, %v464, 0.0
  %v674 = vadd.f32 %v672, %v673
  %v675 = vsel %vm627, %v469, 0.0
  %v676 = vadd.f32 %v674, %v675
  %v677 = vsel %vm627, %v472, 0.0
  %v678 = vadd.f32 %v676, %v677
  %v679 = vsel %vm627, %v477, 0.0
  %v680 = vadd.f32 %v678, %v679
  %v681 = vsel %vm627, %v480, 0.0
  %v682 = vadd.f32 %v680, %v681
  %v683 = vsel %vm627, %v485, 0.0
  %v684 = vadd.f32 %v682, %v683
  %v685 = vsel %vm627, %v488, 0.0
  %v686 = vadd.f32 %v684, %v685
  %v687 = vsel %vm627, %v493, 0.0
  %v688 = vadd.f32 %v686, %v687
  %v689 = vsel %vm627, %v496, 0.0
  %v690 = vadd.f32 %v688, %v689
  %v691 = vsel %vm627, %v501, 0.0
  %v692 = vadd.f32 %v690, %v691
  %v693 = vsel %vm627, %v504, 0.0
  %v694 = vadd.f32 %v692, %v693
  %v695 = vsel %vm627, %v509, 0.0
  %v696 = vadd.f32 %v694, %v695
  %v697 = vsel %vm627, %v512, 0.0
  %v698 = vadd.f32 %v696, %v697
  %v699 = vsel %vm627, %v517, 0.0
  %v700 = vadd.f32 %v698, %v699
  %v701 = vsel %vm627, %v520, 0.0
  %v702 = vadd.f32 %v700, %v701
  %v703 = vsel %vm627, %v525, 0.0
  %v704 = vadd.f32 %v702, %v703
  %v705 = vsel %vm627, %v528, 0.0
  %v706 = vadd.f32 %v704, %v705
  %v707 = vsel %vm627, %v533, 0.0
  %v708 = vadd.f32 %v706, %v707
  %v709 = vsel %vm627, %v536, 0.0
  %v710 = vadd.f32 %v708, %v709
  %v711 = vsel %vm627, %v541, 0.0
  %v712 = vadd.f32 %v710, %v711
  %v713 = vsel %vm627, %v544, 0.0
  %v714 = vadd.f32 %v712, %v713
  %v715 = vsel %vm627, %v549, 0.0
  %v716 = vadd.f32 %v714, %v715
  %v717 = vsel %vm627, %v552, 0.0
  %v718 = vadd.f32 %v716, %v717
  %v719 = vsel %vm627, %v557, 0.0
  %v720 = vadd.f32 %v718, %v719
  %v721 = vsel %vm627, %v560, 0.0
  %v722 = vadd.f32 %v720, %v721
  %v723 = vsel %vm627, %v565, 0.0
  %v724 = vadd.f32 %v722, %v723
  %v725 = vsel %vm627, %v568, 0.0
  %v726 = vadd.f32 %v724, %v725
  %v727 = vsel %vm627, %v573, 0.0
  %v728 = vadd.f32 %v726, %v727
  %v729 = vsel %vm627, %v576, 0.0
  %v730 = vadd.f32 %v728, %v729
  %v731 = vsel %vm627, %v581, 0.0
  %v732 = vadd.f32 %v730, %v731
  %v733 = vsel %vm627, %v584, 0.0
  %v734 = vadd.f32 %v732, %v733
  %v735 = vsel %vm627, %v589, 0.0
  %v736 = vadd.f32 %v734, %v735
  %v737 = vsel %vm627, %v592, 0.0
  %v738 = vadd.f32 %v736, %v737
  %v739 = vsel %vm627, %v597, 0.0
  %v740 = vadd.f32 %v738, %v739
  %v741 = vsel %vm627, %v600, 0.0
  %v742 = vadd.f32 %v740, %v741
  %v743 = vsel %vm627, %v605, 0.0
  %v744 = vadd.f32 %v742, %v743
  %v745 = vsel %vm627, %v608, 0.0
  %v746 = vadd.f32 %v744, %v745
  %v747 = vsel %vm627, %v613, 0.0
  %v748 = vadd.f32 %v746, %v747
  %v749 = vsel %vm627, %v616, 0.0
  %v750 = vadd.f32 %v748, %v749
  %v751 = vsel %vm627, %v621, 0.0
  %v752 = vadd.f32 %v750, %v751
  %v753 = vsel %vm627, %v624, 0.0
  %v754 = vadd.f32 %v752, %v753
  %v755 = vrot.slane %v754, 4
  %v756 = vadd.f32 %v754, %v755
  %v757 = vrot.slane %v756, 2
  %v758 = vadd.f32 %v756, %v757
  %v759 = vrot.slane %v758, 1
  %v760 = vadd.f32 %v758, %v759
  %v761 = vmul.f32 %v760, 0.001953125
  %v762 = vmul.f32 %v373, %v373
  %v763 = vmul.f32 %v376, %v376
  %v764 = vmul.f32 %v381, %v381
  %v765 = vmul.f32 %v384, %v384
  %v766 = vmul.f32 %v389, %v389
  %v767 = vmul.f32 %v392, %v392
  %v768 = vmul.f32 %v397, %v397
  %v769 = vmul.f32 %v400, %v400
  %v770 = vmul.f32 %v405, %v405
  %v771 = vmul.f32 %v408, %v408
  %v772 = vmul.f32 %v413, %v413
  %v773 = vmul.f32 %v416, %v416
  %v774 = vmul.f32 %v421, %v421
  %v775 = vmul.f32 %v424, %v424
  %v776 = vmul.f32 %v429, %v429
  %v777 = vmul.f32 %v432, %v432
  %v778 = vmul.f32 %v437, %v437
  %v779 = vmul.f32 %v440, %v440
  %v780 = vmul.f32 %v445, %v445
  %v781 = vmul.f32 %v448, %v448
  %v782 = vmul.f32 %v453, %v453
  %v783 = vmul.f32 %v456, %v456
  %v784 = vmul.f32 %v461, %v461
  %v785 = vmul.f32 %v464, %v464
  %v786 = vmul.f32 %v469, %v469
  %v787 = vmul.f32 %v472, %v472
  %v788 = vmul.f32 %v477, %v477
  %v789 = vmul.f32 %v480, %v480
  %v790 = vmul.f32 %v485, %v485
  %v791 = vmul.f32 %v488, %v488
  %v792 = vmul.f32 %v493, %v493
  %v793 = vmul.f32 %v496, %v496
  %v794 = vmul.f32 %v501, %v501
  %v795 = vmul.f32 %v504, %v504
  %v796 = vmul.f32 %v509, %v509
  %v797 = vmul.f32 %v512, %v512
  %v798 = vmul.f32 %v517, %v517
  %v799 = vmul.f32 %v520, %v520
  %v800 = vmul.f32 %v525, %v525
  %v801 = vmul.f32 %v528, %v528
  %v802 = vmul.f32 %v533, %v533
  %v803 = vmul.f32 %v536, %v536
  %v804 = vmul.f32 %v541, %v541
  %v805 = vmul.f32 %v544, %v544
  %v806 = vmul.f32 %v549, %v549
  %v807 = vmul.f32 %v552, %v552
  %v808 = vmul.f32 %v557, %v557
  %v809 = vmul.f32 %v560, %v560
  %v810 = vmul.f32 %v565, %v565
  %v811 = vmul.f32 %v568, %v568
  %v812 = vmul.f32 %v573, %v573
  %v813 = vmul.f32 %v576, %v576
  %v814 = vmul.f32 %v581, %v581
  %v815 = vmul.f32 %v584, %v584
  %v816 = vmul.f32 %v589, %v589
  %v817 = vmul.f32 %v592, %v592
  %v818 = vmul.f32 %v597, %v597
  %v819 = vmul.f32 %v600, %v600
  %v820 = vmul.f32 %v605, %v605
  %v821 = vmul.f32 %v608, %v608
  %v822 = vmul.f32 %v613, %v613
  %v823 = vmul.f32 %v616, %v616
  %v824 = vmul.f32 %v621, %v621
  %v825 = vmul.f32 %v624, %v624
  %v826 = vsel %vm627, %v762, 0.0
  %v827 = vsel %vm627, %v763, 0.0
  %v828 = vadd.f32 %v826, %v827
  %v829 = vsel %vm627, %v764, 0.0
  %v830 = vadd.f32 %v828, %v829
  %v831 = vsel %vm627, %v765, 0.0
  %v832 = vadd.f32 %v830, %v831
  %v833 = vsel %vm627, %v766, 0.0
  %v834 = vadd.f32 %v832, %v833
  %v835 = vsel %vm627, %v767, 0.0
  %v836 = vadd.f32 %v834, %v835
  %v837 = vsel %vm627, %v768, 0.0
  %v838 = vadd.f32 %v836, %v837
  %v839 = vsel %vm627, %v769, 0.0
  %v840 = vadd.f32 %v838, %v839
  %v841 = vsel %vm627, %v770, 0.0
  %v842 = vadd.f32 %v840, %v841
  %v843 = vsel %vm627, %v771, 0.0
  %v844 = vadd.f32 %v842, %v843
  %v845 = vsel %vm627, %v772, 0.0
  %v846 = vadd.f32 %v844, %v845
  %v847 = vsel %vm627, %v773, 0.0
  %v848 = vadd.f32 %v846, %v847
  %v849 = vsel %vm627, %v774, 0.0
  %v850 = vadd.f32 %v848, %v849
  %v851 = vsel %vm627, %v775, 0.0
  %v852 = vadd.f32 %v850, %v851
  %v853 = vsel %vm627, %v776, 0.0
  %v854 = vadd.f32 %v852, %v853
  %v855 = vsel %vm627, %v777, 0.0
  %v856 = vadd.f32 %v854, %v855
  %v857 = vsel %vm627, %v778, 0.0
  %v858 = vadd.f32 %v856, %v857
  %v859 = vsel %vm627, %v779, 0.0
  %v860 = vadd.f32 %v858, %v859
  %v861 = vsel %vm627, %v780, 0.0
  %v862 = vadd.f32 %v860, %v861
  %v863 = vsel %vm627, %v781, 0.0
  %v864 = vadd.f32 %v862, %v863
  %v865 = vsel %vm627, %v782, 0.0
  %v866 = vadd.f32 %v864, %v865
  %v867 = vsel %vm627, %v783, 0.0
  %v868 = vadd.f32 %v866, %v867
  %v869 = vsel %vm627, %v784, 0.0
  %v870 = vadd.f32 %v868, %v869
  %v871 = vsel %vm627, %v785, 0.0
  %v872 = vadd.f32 %v870, %v871
  %v873 = vsel %vm627, %v786, 0.0
  %v874 = vadd.f32 %v872, %v873
  %v875 = vsel %vm627, %v787, 0.0
  %v876 = vadd.f32 %v874, %v875
  %v877 = vsel %vm627, %v788, 0.0
  %v878 = vadd.f32 %v876, %v877
  %v879 = vsel %vm627, %v789, 0.0
  %v880 = vadd.f32 %v878, %v879
  %v881 = vsel %vm627, %v790, 0.0
  %v882 = vadd.f32 %v880, %v881
  %v883 = vsel %vm627, %v791, 0.0
  %v884 = vadd.f32 %v882, %v883
  %v885 = vsel %vm627, %v792, 0.0
  %v886 = vadd.f32 %v884, %v885
  %v887 = vsel %vm627, %v793, 0.0
  %v888 = vadd.f32 %v886, %v887
  %v889 = vsel %vm627, %v794, 0.0
  %v890 = vadd.f32 %v888, %v889
  %v891 = vsel %vm627, %v795, 0.0
  %v892 = vadd.f32 %v890, %v891
  %v893 = vsel %vm627, %v796, 0.0
  %v894 = vadd.f32 %v892, %v893
  %v895 = vsel %vm627, %v797, 0.0
  %v896 = vadd.f32 %v894, %v895
  %v897 = vsel %vm627, %v798, 0.0
  %v898 = vadd.f32 %v896, %v897
  %v899 = vsel %vm627, %v799, 0.0
  %v900 = vadd.f32 %v898, %v899
  %v901 = vsel %vm627, %v800, 0.0
  %v902 = vadd.f32 %v900, %v901
  %v903 = vsel %vm627, %v801, 0.0
  %v904 = vadd.f32 %v902, %v903
  %v905 = vsel %vm627, %v802, 0.0
  %v906 = vadd.f32 %v904, %v905
  %v907 = vsel %vm627, %v803, 0.0
  %v908 = vadd.f32 %v906, %v907
  %v909 = vsel %vm627, %v804, 0.0
  %v910 = vadd.f32 %v908, %v909
  %v911 = vsel %vm627, %v805, 0.0
  %v912 = vadd.f32 %v910, %v911
  %v913 = vsel %vm627, %v806, 0.0
  %v914 = vadd.f32 %v912, %v913
  %v915 = vsel %vm627, %v807, 0.0
  %v916 = vadd.f32 %v914, %v915
  %v917 = vsel %vm627, %v808, 0.0
  %v918 = vadd.f32 %v916, %v917
  %v919 = vsel %vm627, %v809, 0.0
  %v920 = vadd.f32 %v918, %v919
  %v921 = vsel %vm627, %v810, 0.0
  %v922 = vadd.f32 %v920, %v921
  %v923 = vsel %vm627, %v811, 0.0
  %v924 = vadd.f32 %v922, %v923
  %v925 = vsel %vm627, %v812, 0.0
  %v926 = vadd.f32 %v924, %v925
  %v927 = vsel %vm627, %v813, 0.0
  %v928 = vadd.f32 %v926, %v927
  %v929 = vsel %vm627, %v814, 0.0
  %v930 = vadd.f32 %v928, %v929
  %v931 = vsel %vm627, %v815, 0.0
  %v932 = vadd.f32 %v930, %v931
  %v933 = vsel %vm627, %v816, 0.0
  %v934 = vadd.f32 %v932, %v933
  %v935 = vsel %vm627, %v817, 0.0
  %v936 = vadd.f32 %v934, %v935
  %v937 = vsel %vm627, %v818, 0.0
  %v938 = vadd.f32 %v936, %v937
  %v939 = vsel %vm627, %v819, 0.0
  %v940 = vadd.f32 %v938, %v939
  %v941 = vsel %vm627, %v820, 0.0
  %v942 = vadd.f32 %v940, %v941
  %v943 = vsel %vm627, %v821, 0.0
  %v944 = vadd.f32 %v942, %v943
  %v945 = vsel %vm627, %v822, 0.0
  %v946 = vadd.f32 %v944, %v945
  %v947 = vsel %vm627, %v823, 0.0
  %v948 = vadd.f32 %v946, %v947
  %v949 = vsel %vm627, %v824, 0.0
  %v950 = vadd.f32 %v948, %v949
  %v951 = vsel %vm627, %v825, 0.0
  %v952 = vadd.f32 %v950, %v951
  %v953 = vrot.slane %v952, 4
  %v954 = vadd.f32 %v952, %v953
  %v955 = vrot.slane %v954, 2
  %v956 = vadd.f32 %v954, %v955
  %v957 = vrot.slane %v956, 1
  %v958 = vadd.f32 %v956, %v957
  %v959 = vmul.f32 %v958, 0.001953125
  %v960 = vmul.f32 %v761, %v761
  %v961 = vsub.f32 %v959, %v960
  %v962 = vld [vmem:[%s2] sm:$0x1]
  %v963 = vadd.f32 %v961, 1e-05
  %v964 = vrsqrt.pop %v963
  %v965 = vmul.f32 %v962, %v964
  %v966 = vld [vmem:[%s3] sm:$0x1]
  %v967 = vmul.f32 %v761, %v965
  %v968 = vsub.f32 %v966, %v967
  %v970 = vlaneseq
  %v971 = vshrl.u32 %v970, 7
  %v972 = vsub.s32 0, %v971
  %v973 = vrot.slane %v965, %v972
  %v975 = vmul.f32 %v373, %v973
  %v976 = vmul.f32 %v376, %v973
  %v977 = vmul.f32 %v381, %v973
  %v978 = vmul.f32 %v384, %v973
  %v979 = vmul.f32 %v389, %v973
  %v980 = vmul.f32 %v392, %v973
  %v981 = vmul.f32 %v397, %v973
  %v982 = vmul.f32 %v400, %v973
  %v983 = vmul.f32 %v405, %v973
  %v984 = vmul.f32 %v408, %v973
  %v985 = vmul.f32 %v413, %v973
  %v986 = vmul.f32 %v416, %v973
  %v987 = vmul.f32 %v421, %v973
  %v988 = vmul.f32 %v424, %v973
  %v989 = vmul.f32 %v429, %v973
  %v990 = vmul.f32 %v432, %v973
  %v991 = vmul.f32 %v437, %v973
  %v992 = vmul.f32 %v440, %v973
  %v993 = vmul.f32 %v445, %v973
  %v994 = vmul.f32 %v448, %v973
  %v995 = vmul.f32 %v453, %v973
  %v996 = vmul.f32 %v456, %v973
  %v997 = vmul.f32 %v461, %v973
  %v998 = vmul.f32 %v464, %v973
  %v999 = vmul.f32 %v469, %v973
  %v1000 = vmul.f32 %v472, %v973
  %v1001 = vmul.f32 %v477, %v973
  %v1002 = vmul.f32 %v480, %v973
  %v1003 = vmul.f32 %v485, %v973
  %v1004 = vmul.f32 %v488, %v973
  %v1005 = vmul.f32 %v493, %v973
  %v1006 = vmul.f32 %v496, %v973
  %v1007 = vmul.f32 %v501, %v973
  %v1008 = vmul.f32 %v504, %v973
  %v1009 = vmul.f32 %v509, %v973
  %v1010 = vmul.f32 %v512, %v973
  %v1011 = vmul.f32 %v517, %v973
  %v1012 = vmul.f32 %v520, %v973
  %v1013 = vmul.f32 %v525, %v973
  %v1014 = vmul.f32 %v528, %v973
  %v1015 = vmul.f32 %v533, %v973
  %v1016 = vmul.f32 %v536, %v973
  %v1017 = vmul.f32 %v541, %v973
  %v1018 = vmul.f32 %v544, %v973
  %v1019 = vmul.f32 %v549, %v973
  %v1020 = vmul.f32 %v552, %v973
  %v1021 = vmul.f32 %v557, %v973
  %v1022 = vmul.f32 %v560, %v973
  %v1023 = vmul.f32 %v565, %v973
  %v1024 = vmul.f32 %v568, %v973
  %v1025 = vmul.f32 %v573, %v973
  %v1026 = vmul.f32 %v576, %v973
  %v1027 = vmul.f32 %v581, %v973
  %v1028 = vmul.f32 %v584, %v973
  %v1029 = vmul.f32 %v589, %v973
  %v1030 = vmul.f32 %v592, %v973
  %v1031 = vmul.f32 %v597, %v973
  %v1032 = vmul.f32 %v600, %v973
  %v1033 = vmul.f32 %v605, %v973
  %v1034 = vmul.f32 %v608, %v973
  %v1035 = vmul.f32 %v613, %v973
  %v1036 = vmul.f32 %v616, %v973
  %v1037 = vmul.f32 %v621, %v973
  %v1038 = vmul.f32 %v624, %v973
  %v1040 = vlaneseq
  %v1041 = vshrl.u32 %v1040, 7
  %v1042 = vsub.s32 0, %v1041
  %v1043 = vrot.slane %v968, %v1042
  %v1045 = vadd.f32 %v975, %v1043
  %v1046 = vadd.f32 %v976, %v1043
  %v1047 = vadd.f32 %v977, %v1043
  %v1048 = vadd.f32 %v978, %v1043
  %v1049 = vadd.f32 %v979, %v1043
  %v1050 = vadd.f32 %v980, %v1043
  %v1051 = vadd.f32 %v981, %v1043
  %v1052 = vadd.f32 %v982, %v1043
  %v1053 = vadd.f32 %v983, %v1043
  %v1054 = vadd.f32 %v984, %v1043
  %v1055 = vadd.f32 %v985, %v1043
  %v1056 = vadd.f32 %v986, %v1043
  %v1057 = vadd.f32 %v987, %v1043
  %v1058 = vadd.f32 %v988, %v1043
  %v1059 = vadd.f32 %v989, %v1043
  %v1060 = vadd.f32 %v990, %v1043
  %v1061 = vadd.f32 %v991, %v1043
  %v1062 = vadd.f32 %v992, %v1043
  %v1063 = vadd.f32 %v993, %v1043
  %v1064 = vadd.f32 %v994, %v1043
  %v1065 = vadd.f32 %v995, %v1043
  %v1066 = vadd.f32 %v996, %v1043
  %v1067 = vadd.f32 %v997, %v1043
  %v1068 = vadd.f32 %v998, %v1043
  %v1069 = vadd.f32 %v999, %v1043
  %v1070 = vadd.f32 %v1000, %v1043
  %v1071 = vadd.f32 %v1001, %v1043
  %v1072 = vadd.f32 %v1002, %v1043
  %v1073 = vadd.f32 %v1003, %v1043
  %v1074 = vadd.f32 %v1004, %v1043
  %v1075 = vadd.f32 %v1005, %v1043
  %v1076 = vadd.f32 %v1006, %v1043
  %v1077 = vadd.f32 %v1007, %v1043
  %v1078 = vadd.f32 %v1008, %v1043
  %v1079 = vadd.f32 %v1009, %v1043
  %v1080 = vadd.f32 %v1010, %v1043
  %v1081 = vadd.f32 %v1011, %v1043
  %v1082 = vadd.f32 %v1012, %v1043
  %v1083 = vadd.f32 %v1013, %v1043
  %v1084 = vadd.f32 %v1014, %v1043
  %v1085 = vadd.f32 %v1015, %v1043
  %v1086 = vadd.f32 %v1016, %v1043
  %v1087 = vadd.f32 %v1017, %v1043
  %v1088 = vadd.f32 %v1018, %v1043
  %v1089 = vadd.f32 %v1019, %v1043
  %v1090 = vadd.f32 %v1020, %v1043
  %v1091 = vadd.f32 %v1021, %v1043
  %v1092 = vadd.f32 %v1022, %v1043
  %v1093 = vadd.f32 %v1023, %v1043
  %v1094 = vadd.f32 %v1024, %v1043
  %v1095 = vadd.f32 %v1025, %v1043
  %v1096 = vadd.f32 %v1026, %v1043
  %v1097 = vadd.f32 %v1027, %v1043
  %v1098 = vadd.f32 %v1028, %v1043
  %v1099 = vadd.f32 %v1029, %v1043
  %v1100 = vadd.f32 %v1030, %v1043
  %v1101 = vadd.f32 %v1031, %v1043
  %v1102 = vadd.f32 %v1032, %v1043
  %v1103 = vadd.f32 %v1033, %v1043
  %v1104 = vadd.f32 %v1034, %v1043
  %v1105 = vadd.f32 %v1035, %v1043
  %v1106 = vadd.f32 %v1036, %v1043
  %v1107 = vadd.f32 %v1037, %v1043
  %v1108 = vadd.f32 %v1038, %v1043
  %v1109 = vsel %vm627, %v1045, -inf
  %v1110 = vsel %vm627, %v1046, -inf
  %v1111 = vmax.f32 %v1109, %v1110
  %v1112 = vsel %vm627, %v1047, -inf
  %v1113 = vmax.f32 %v1111, %v1112
  %v1114 = vsel %vm627, %v1048, -inf
  %v1115 = vmax.f32 %v1113, %v1114
  %v1116 = vsel %vm627, %v1049, -inf
  %v1117 = vsel %vm627, %v1050, -inf
  %v1118 = vmax.f32 %v1116, %v1117
  %v1119 = vsel %vm627, %v1051, -inf
  %v1120 = vmax.f32 %v1118, %v1119
  %v1121 = vsel %vm627, %v1052, -inf
  %v1122 = vmax.f32 %v1120, %v1121
  %v1123 = vsel %vm627, %v1053, -inf
  %v1124 = vsel %vm627, %v1054, -inf
  %v1125 = vmax.f32 %v1123, %v1124
  %v1126 = vsel %vm627, %v1055, -inf
  %v1127 = vmax.f32 %v1125, %v1126
  %v1128 = vsel %vm627, %v1056, -inf
  %v1129 = vmax.f32 %v1127, %v1128
  %v1130 = vsel %vm627, %v1057, -inf
  %v1131 = vsel %vm627, %v1058, -inf
  %v1132 = vmax.f32 %v1130, %v1131
  %v1133 = vsel %vm627, %v1059, -inf
  %v1134 = vmax.f32 %v1132, %v1133
  %v1135 = vsel %vm627, %v1060, -inf
  %v1136 = vmax.f32 %v1134, %v1135
  %v1137 = vsel %vm627, %v1061, -inf
  %v1138 = vsel %vm627, %v1062, -inf
  %v1139 = vmax.f32 %v1137, %v1138
  %v1140 = vsel %vm627, %v1063, -inf
  %v1141 = vmax.f32 %v1139, %v1140
  %v1142 = vsel %vm627, %v1064, -inf
  %v1143 = vmax.f32 %v1141, %v1142
  %v1144 = vsel %vm627, %v1065, -inf
  %v1145 = vsel %vm627, %v1066, -inf
  %v1146 = vmax.f32 %v1144, %v1145
  %v1147 = vsel %vm627, %v1067, -inf
  %v1148 = vmax.f32 %v1146, %v1147
  %v1149 = vsel %vm627, %v1068, -inf
  %v1150 = vmax.f32 %v1148, %v1149
  %v1151 = vsel %vm627, %v1069, -inf
  %v1152 = vsel %vm627, %v1070, -inf
  %v1153 = vmax.f32 %v1151, %v1152
  %v1154 = vsel %vm627, %v1071, -inf
  %v1155 = vmax.f32 %v1153, %v1154
  %v1156 = vsel %vm627, %v1072, -inf
  %v1157 = vmax.f32 %v1155, %v1156
  %v1158 = vsel %vm627, %v1073, -inf
  %v1159 = vsel %vm627, %v1074, -inf
  %v1160 = vmax.f32 %v1158, %v1159
  %v1161 = vsel %vm627, %v1075, -inf
  %v1162 = vmax.f32 %v1160, %v1161
  %v1163 = vsel %vm627, %v1076, -inf
  %v1164 = vmax.f32 %v1162, %v1163
  %v1165 = vsel %vm627, %v1077, -inf
  %v1166 = vsel %vm627, %v1078, -inf
  %v1167 = vmax.f32 %v1165, %v1166
  %v1168 = vsel %vm627, %v1079, -inf
  %v1169 = vmax.f32 %v1167, %v1168
  %v1170 = vsel %vm627, %v1080, -inf
  %v1171 = vmax.f32 %v1169, %v1170
  %v1172 = vsel %vm627, %v1081, -inf
  %v1173 = vsel %vm627, %v1082, -inf
  %v1174 = vmax.f32 %v1172, %v1173
  %v1175 = vsel %vm627, %v1083, -inf
  %v1176 = vmax.f32 %v1174, %v1175
  %v1177 = vsel %vm627, %v1084, -inf
  %v1178 = vmax.f32 %v1176, %v1177
  %v1179 = vsel %vm627, %v1085, -inf
  %v1180 = vsel %vm627, %v1086, -inf
  %v1181 = vmax.f32 %v1179, %v1180
  %v1182 = vsel %vm627, %v1087, -inf
  %v1183 = vmax.f32 %v1181, %v1182
  %v1184 = vsel %vm627, %v1088, -inf
  %v1185 = vmax.f32 %v1183, %v1184
  %v1186 = vsel %vm627, %v1089, -inf
  %v1187 = vsel %vm627, %v1090, -inf
  %v1188 = vmax.f32 %v1186, %v1187
  %v1189 = vsel %vm627, %v1091, -inf
  %v1190 = vmax.f32 %v1188, %v1189
  %v1191 = vsel %vm627, %v1092, -inf
  %v1192 = vmax.f32 %v1190, %v1191
  %v1193 = vsel %vm627, %v1093, -inf
  %v1194 = vsel %vm627, %v1094, -inf
  %v1195 = vmax.f32 %v1193, %v1194
  %v1196 = vsel %vm627, %v1095, -inf
  %v1197 = vmax.f32 %v1195, %v1196
  %v1198 = vsel %vm627, %v1096, -inf
  %v1199 = vmax.f32 %v1197, %v1198
  %v1200 = vsel %vm627, %v1097, -inf
  %v1201 = vsel %vm627, %v1098, -inf
  %v1202 = vmax.f32 %v1200, %v1201
  %v1203 = vsel %vm627, %v1099, -inf
  %v1204 = vmax.f32 %v1202, %v1203
  %v1205 = vsel %vm627, %v1100, -inf
  %v1206 = vmax.f32 %v1204, %v1205
  %v1207 = vsel %vm627, %v1101, -inf
  %v1208 = vsel %vm627, %v1102, -inf
  %v1209 = vmax.f32 %v1207, %v1208
  %v1210 = vsel %vm627, %v1103, -inf
  %v1211 = vmax.f32 %v1209, %v1210
  %v1212 = vsel %vm627, %v1104, -inf
  %v1213 = vmax.f32 %v1211, %v1212
  %v1214 = vsel %vm627, %v1105, -inf
  %v1215 = vsel %vm627, %v1106, -inf
  %v1216 = vmax.f32 %v1214, %v1215
  %v1217 = vsel %vm627, %v1107, -inf
  %v1218 = vmax.f32 %v1216, %v1217
  %v1219 = vsel %vm627, %v1108, -inf
  %v1220 = vmax.f32 %v1218, %v1219
  %v1221 = vmax.f32 %v1115, 0.0
  %v1222 = vmax.f32 %v1122, 0.0
  %v1223 = vmax.f32 %v1129, 0.0
  %v1224 = vmax.f32 %v1136, 0.0
  %v1225 = vmax.f32 %v1143, 0.0
  %v1226 = vmax.f32 %v1150, 0.0
  %v1227 = vmax.f32 %v1157, 0.0
  %v1228 = vmax.f32 %v1164, 0.0
  %v1229 = vmax.f32 %v1171, 0.0
  %v1230 = vmax.f32 %v1178, 0.0
  %v1231 = vmax.f32 %v1185, 0.0
  %v1232 = vmax.f32 %v1192, 0.0
  %v1233 = vmax.f32 %v1199, 0.0
  %v1234 = vmax.f32 %v1206, 0.0
  %v1235 = vmax.f32 %v1213, 0.0
  %v1236 = vmax.f32 %v1220, 0.0
  %v1253 = vrot.slane %v1222, 7
  %vm1254 = vcmask 1041409
  %v1255 = vsel %vm1254, %v1253, %v1221
  %v1256 = vrot.slane %v1223, 6
  %vm1257 = vcmask 1042434
  %v1258 = vsel %vm1257, %v1256, %v1255
  %v1259 = vrot.slane %v1224, 5
  %vm1260 = vcmask 1043459
  %v1261 = vsel %vm1260, %v1259, %v1258
  %v1262 = vrot.slane %v1225, 4
  %vm1263 = vcmask 1044484
  %v1264 = vsel %vm1263, %v1262, %v1261
  %v1265 = vrot.slane %v1226, 3
  %vm1266 = vcmask 1045509
  %v1267 = vsel %vm1266, %v1265, %v1264
  %v1268 = vrot.slane %v1227, 2
  %vm1269 = vcmask 1046534
  %v1270 = vsel %vm1269, %v1268, %v1267
  %v1271 = vrot.slane %v1228, 1
  %vm1272 = vcmask 1047559
  %v1273 = vsel %vm1272, %v1271, %v1270
  %v1274 = vrot.slane %v1230, 7
  %v1275 = vsel %vm1254, %v1274, %v1229
  %v1276 = vrot.slane %v1231, 6
  %v1277 = vsel %vm1257, %v1276, %v1275
  %v1278 = vrot.slane %v1232, 5
  %v1279 = vsel %vm1260, %v1278, %v1277
  %v1280 = vrot.slane %v1233, 4
  %v1281 = vsel %vm1263, %v1280, %v1279
  %v1282 = vrot.slane %v1234, 3
  %v1283 = vsel %vm1266, %v1282, %v1281
  %v1284 = vrot.slane %v1235, 2
  %v1285 = vsel %vm1269, %v1284, %v1283
  %v1286 = vrot.slane %v1236, 1
  %v1287 = vsel %vm1272, %v1286, %v1285
  %1290 = vst.msk [vmem:[%s4] sm:$0xff] %vm627, %v1273
  %1291 = vst.msk [vmem:[%s4 + $0x10] sm:$0xff] %vm627, %v1287
  %v1292 = vrot.slane %v1221, 1
  %v1293 = vsel %vm1254, %v1222, %v1292
  %v1294 = vrot.slane %v1223, 7
  %v1295 = vsel %vm1257, %v1294, %v1293
  %v1296 = vrot.slane %v1224, 6
  %v1297 = vsel %vm1260, %v1296, %v1295
  %v1298 = vrot.slane %v1225, 5
  %v1299 = vsel %vm1263, %v1298, %v1297
  %v1300 = vrot.slane %v1226, 4
  %v1301 = vsel %vm1266, %v1300, %v1299
  %v1302 = vrot.slane %v1227, 3
  %v1303 = vsel %vm1269, %v1302, %v1301
  %v1304 = vrot.slane %v1228, 2
  %v1305 = vsel %vm1272, %v1304, %v1303
  %v1306 = vrot.slane %v1229, 1
  %v1307 = vsel %vm1254, %v1230, %v1306
  %v1308 = vrot.slane %v1231, 7
  %v1309 = vsel %vm1257, %v1308, %v1307
  %v1310 = vrot.slane %v1232, 6
  %v1311 = vsel %vm1260, %v1310, %v1309
  %v1312 = vrot.slane %v1233, 5
  %v1313 = vsel %vm1263, %v1312, %v1311
  %v1314 = vrot.slane %v1234, 4
  %v1315 = vsel %vm1266, %v1314, %v1313
  %v1316 = vrot.slane %v1235, 3
  %v1317 = vsel %vm1269, %v1316, %v1315
  %v1318 = vrot.slane %v1236, 2
  %v1319 = vsel %vm1272, %v1318, %v1317
  %1320 = vrot.lane.b32.xlu0 %v1305, 32
  %v1321 = vpop.permute.xlu0 %1320
  %1322 = vrot.lane.b32.xlu0 %v1319, 32
  %v1323 = vpop.permute.xlu0 %1322
  %vm1326 = vcmask 523520
  %1327 = vst.msk [vmem:[%s4] sm:$0xff] %vm1326, %v1321
  %1328 = vst.msk [vmem:[%s4 + $0x10] sm:$0xff] %vm1326, %v1323
  %v1329 = vrot.slane %v1221, 2
  %v1330 = vrot.slane %v1222, 1
  %v1331 = vsel %vm1254, %v1330, %v1329
  %v1332 = vsel %vm1257, %v1223, %v1331
  %v1333 = vrot.slane %v1224, 7
  %v1334 = vsel %vm1260, %v1333, %v1332
  %v1335 = vrot.slane %v1225, 6
  %v1336 = vsel %vm1263, %v1335, %v1334
  %v1337 = vrot.slane %v1226, 5
  %v1338 = vsel %vm1266, %v1337, %v1336
  %v1339 = vrot.slane %v1227, 4
  %v1340 = vsel %vm1269, %v1339, %v1338
  %v1341 = vrot.slane %v1228, 3
  %v1342 = vsel %vm1272, %v1341, %v1340
  %v1343 = vrot.slane %v1229, 2
  %v1344 = vrot.slane %v1230, 1
  %v1345 = vsel %vm1254, %v1344, %v1343
  %v1346 = vsel %vm1257, %v1231, %v1345
  %v1347 = vrot.slane %v1232, 7
  %v1348 = vsel %vm1260, %v1347, %v1346
  %v1349 = vrot.slane %v1233, 6
  %v1350 = vsel %vm1263, %v1349, %v1348
  %v1351 = vrot.slane %v1234, 5
  %v1352 = vsel %vm1266, %v1351, %v1350
  %v1353 = vrot.slane %v1235, 4
  %v1354 = vsel %vm1269, %v1353, %v1352
  %v1355 = vrot.slane %v1236, 3
  %v1356 = vsel %vm1272, %v1355, %v1354
  %1357 = vrot.lane.b32.xlu0 %v1342, 64
  %v1358 = vpop.permute.xlu0 %1357
  %1359 = vrot.lane.b32.xlu0 %v1356, 64
  %v1360 = vpop.permute.xlu0 %1359
  %vm1363 = vcmask 785920
  %1364 = vst.msk [vmem:[%s4] sm:$0xff] %vm1363, %v1358
  %1365 = vst.msk [vmem:[%s4 + $0x10] sm:$0xff] %vm1363, %v1360
  %v1366 = vrot.slane %v1221, 3
  %v1367 = vrot.slane %v1222, 2
  %v1368 = vsel %vm1254, %v1367, %v1366
  %v1369 = vrot.slane %v1223, 1
  %v1370 = vsel %vm1257, %v1369, %v1368
  %v1371 = vsel %vm1260, %v1224, %v1370
  %v1372 = vrot.slane %v1225, 7
  %v1373 = vsel %vm1263, %v1372, %v1371
  %v1374 = vrot.slane %v1226, 6
  %v1375 = vsel %vm1266, %v1374, %v1373
  %v1376 = vrot.slane %v1227, 5
  %v1377 = vsel %vm1269, %v1376, %v1375
  %v1378 = vrot.slane %v1228, 4
  %v1379 = vsel %vm1272, %v1378, %v1377
  %v1380 = vrot.slane %v1229, 3
  %v1381 = vrot.slane %v1230, 2
  %v1382 = vsel %vm1254, %v1381, %v1380
  %v1383 = vrot.slane %v1231, 1
  %v1384 = vsel %vm1257, %v1383, %v1382
  %v1385 = vsel %vm1260, %v1232, %v1384
  %v1386 = vrot.slane %v1233, 7
  %v1387 = vsel %vm1263, %v1386, %v1385
  %v1388 = vrot.slane %v1234, 6
  %v1389 = vsel %vm1266, %v1388, %v1387
  %v1390 = vrot.slane %v1235, 5
  %v1391 = vsel %vm1269, %v1390, %v1389
  %v1392 = vrot.slane %v1236, 4
  %v1393 = vsel %vm1272, %v1392, %v1391
  %1394 = vrot.lane.b32.xlu0 %v1379, 96
  %v1395 = vpop.permute.xlu0 %1394
  %1396 = vrot.lane.b32.xlu0 %v1393, 96
  %v1397 = vpop.permute.xlu0 %1396
  %vm1400 = vcmask 1048320
  %1401 = vst.msk [vmem:[%s4] sm:$0xff] %vm1400, %v1395
  %1402 = vst.msk [vmem:[%s4 + $0x10] sm:$0xff] %vm1400, %v1397
  %v1403 = vrot.slane %v1221, 4
  %v1404 = vrot.slane %v1222, 3
  %v1405 = vsel %vm1254, %v1404, %v1403
  %v1406 = vrot.slane %v1223, 2
  %v1407 = vsel %vm1257, %v1406, %v1405
  %v1408 = vrot.slane %v1224, 1
  %v1409 = vsel %vm1260, %v1408, %v1407
  %v1410 = vsel %vm1263, %v1225, %v1409
  %v1411 = vrot.slane %v1226, 7
  %v1412 = vsel %vm1266, %v1411, %v1410
  %v1413 = vrot.slane %v1227, 6
  %v1414 = vsel %vm1269, %v1413, %v1412
  %v1415 = vrot.slane %v1228, 5
  %v1416 = vsel %vm1272, %v1415, %v1414
  %v1417 = vrot.slane %v1229, 4
  %v1418 = vrot.slane %v1230, 3
  %v1419 = vsel %vm1254, %v1418, %v1417
  %v1420 = vrot.slane %v1231, 2
  %v1421 = vsel %vm1257, %v1420, %v1419
  %v1422 = vrot.slane %v1232, 1
  %v1423 = vsel %vm1260, %v1422, %v1421
  %v1424 = vsel %vm1263, %v1233, %v1423
  %v1425 = vrot.slane %v1234, 7
  %v1426 = vsel %vm1266, %v1425, %v1424
  %v1427 = vrot.slane %v1235, 6
  %v1428 = vsel %vm1269, %v1427, %v1426
  %v1429 = vrot.slane %v1236, 5
  %v1430 = vsel %vm1272, %v1429, %v1428
  %1433 = vst.msk [vmem:[%s4 + $0x8] sm:$0xff] %vm627, %v1416
  %1434 = vst.msk [vmem:[%s4 + $0x18] sm:$0xff] %vm627, %v1430
  %v1435 = vrot.slane %v1221, 5
  %v1436 = vrot.slane %v1222, 4
  %v1437 = vsel %vm1254, %v1436, %v1435
  %v1438 = vrot.slane %v1223, 3
  %v1439 = vsel %vm1257, %v1438, %v1437
  %v1440 = vrot.slane %v1224, 2
  %v1441 = vsel %vm1260, %v1440, %v1439
  %v1442 = vrot.slane %v1225, 1
  %v1443 = vsel %vm1263, %v1442, %v1441
  %v1444 = vsel %vm1266, %v1226, %v1443
  %v1445 = vrot.slane %v1227, 7
  %v1446 = vsel %vm1269, %v1445, %v1444
  %v1447 = vrot.slane %v1228, 6
  %v1448 = vsel %vm1272, %v1447, %v1446
  %v1449 = vrot.slane %v1229, 5
  %v1450 = vrot.slane %v1230, 4
  %v1451 = vsel %vm1254, %v1450, %v1449
  %v1452 = vrot.slane %v1231, 3
  %v1453 = vsel %vm1257, %v1452, %v1451
  %v1454 = vrot.slane %v1232, 2
  %v1455 = vsel %vm1260, %v1454, %v1453
  %v1456 = vrot.slane %v1233, 1
  %v1457 = vsel %vm1263, %v1456, %v1455
  %v1458 = vsel %vm1266, %v1234, %v1457
  %v1459 = vrot.slane %v1235, 7
  %v1460 = vsel %vm1269, %v1459, %v1458
  %v1461 = vrot.slane %v1236, 6
  %v1462 = vsel %vm1272, %v1461, %v1460
  %1463 = vrot.lane.b32.xlu0 %v1448, 32
  %v1464 = vpop.permute.xlu0 %1463
  %1465 = vrot.lane.b32.xlu0 %v1462, 32
  %v1466 = vpop.permute.xlu0 %1465
  %1469 = vst.msk [vmem:[%s4 + $0x8] sm:$0xff] %vm1326, %v1464
  %1470 = vst.msk [vmem:[%s4 + $0x18] sm:$0xff] %vm1326, %v1466
  %v1471 = vrot.slane %v1221, 6
  %v1472 = vrot.slane %v1222, 5
  %v1473 = vsel %vm1254, %v1472, %v1471
  %v1474 = vrot.slane %v1223, 4
  %v1475 = vsel %vm1257, %v1474, %v1473
  %v1476 = vrot.slane %v1224, 3
  %v1477 = vsel %vm1260, %v1476, %v1475
  %v1478 = vrot.slane %v1225, 2
  %v1479 = vsel %vm1263, %v1478, %v1477
  %v1480 = vrot.slane %v1226, 1
  %v1481 = vsel %vm1266, %v1480, %v1479
  %v1482 = vsel %vm1269, %v1227, %v1481
  %v1483 = vrot.slane %v1228, 7
  %v1484 = vsel %vm1272, %v1483, %v1482
  %v1485 = vrot.slane %v1229, 6
  %v1486 = vrot.slane %v1230, 5
  %v1487 = vsel %vm1254, %v1486, %v1485
  %v1488 = vrot.slane %v1231, 4
  %v1489 = vsel %vm1257, %v1488, %v1487
  %v1490 = vrot.slane %v1232, 3
  %v1491 = vsel %vm1260, %v1490, %v1489
  %v1492 = vrot.slane %v1233, 2
  %v1493 = vsel %vm1263, %v1492, %v1491
  %v1494 = vrot.slane %v1234, 1
  %v1495 = vsel %vm1266, %v1494, %v1493
  %v1496 = vsel %vm1269, %v1235, %v1495
  %v1497 = vrot.slane %v1236, 7
  %v1498 = vsel %vm1272, %v1497, %v1496
  %1499 = vrot.lane.b32.xlu0 %v1484, 64
  %v1500 = vpop.permute.xlu0 %1499
  %1501 = vrot.lane.b32.xlu0 %v1498, 64
  %v1502 = vpop.permute.xlu0 %1501
  %1505 = vst.msk [vmem:[%s4 + $0x8] sm:$0xff] %vm1363, %v1500
  %1506 = vst.msk [vmem:[%s4 + $0x18] sm:$0xff] %vm1363, %v1502
  %v1507 = vrot.slane %v1221, 7
  %v1508 = vrot.slane %v1222, 6
  %v1509 = vsel %vm1254, %v1508, %v1507
  %v1510 = vrot.slane %v1223, 5
  %v1511 = vsel %vm1257, %v1510, %v1509
  %v1512 = vrot.slane %v1224, 4
  %v1513 = vsel %vm1260, %v1512, %v1511
  %v1514 = vrot.slane %v1225, 3
  %v1515 = vsel %vm1263, %v1514, %v1513
  %v1516 = vrot.slane %v1226, 2
  %v1517 = vsel %vm1266, %v1516, %v1515
  %v1518 = vrot.slane %v1227, 1
  %v1519 = vsel %vm1269, %v1518, %v1517
  %v1520 = vsel %vm1272, %v1228, %v1519
  %v1521 = vrot.slane %v1229, 7
  %v1522 = vrot.slane %v1230, 6
  %v1523 = vsel %vm1254, %v1522, %v1521
  %v1524 = vrot.slane %v1231, 5
  %v1525 = vsel %vm1257, %v1524, %v1523
  %v1526 = vrot.slane %v1232, 4
  %v1527 = vsel %vm1260, %v1526, %v1525
  %v1528 = vrot.slane %v1233, 3
  %v1529 = vsel %vm1263, %v1528, %v1527
  %v1530 = vrot.slane %v1234, 2
  %v1531 = vsel %vm1266, %v1530, %v1529
  %v1532 = vrot.slane %v1235, 1
  %v1533 = vsel %vm1269, %v1532, %v1531
  %v1534 = vsel %vm1272, %v1236, %v1533
  %1535 = vrot.lane.b32.xlu0 %v1520, 96
  %v1536 = vpop.permute.xlu0 %1535
  %1537 = vrot.lane.b32.xlu0 %v1534, 96
  %v1538 = vpop.permute.xlu0 %1537
  %1541 = vst.msk [vmem:[%s4 + $0x8] sm:$0xff] %vm1400, %v1536
  %1542 = vst.msk [vmem:[%s4 + $0x18] sm:$0xff] %vm1400, %v1538
  // Predicated region
  $region18: #{convnet_forward.1} parent=0 // pred_check
    _
  $region19: #{convnet_forward.1} parent=0 // pred_check_branch
    %1544 = sbr.rel (0) target = $region21
  $region20: #{convnet_forward.1} parent=0 // pred_region
    _
  $region21: #{convnet_forward.1} parent=0 // pred_fallthru
    _
  // Predicated region
  $region22: #{convnet_forward.1} parent=0 // pred_check
    _
  $region23: #{convnet_forward.1} parent=0 // pred_check_branch
    %1546 = sbr.rel (0) target = $region25
  $region24: #{convnet_forward.1} parent=0 // pred_region
    _
  $region25: #{convnet_forward.1} parent=0 // pred_fallthru
    _

</llo_original>
